<compile_context>
chip_gen: v7x
topology: tpu7x:2x2x1
jax: 0.10.0
libtpu: 0.0.40
codegen_flags: <defaults>
</compile_context>

<pallas_src>
import jax
import jax.numpy as jnp
from jax.experimental import pallas as pl
from jax.experimental.pallas import tpu as pltpu

_LN_EPS = 1e-5  # PyTorch nn.LayerNorm default


def _round_up(x, m):
    return (x + m - 1) // m * m


def _cdiv(a, b):
    return (a + b - 1) // b


def _physical_vmem_bytes():
    """Per-core physical VMEM; conservative 64 MiB (v7x) fallback."""
    try:
        info = pltpu.get_tpu_info()
        for attr in ("vmem_capacity_bytes", "vmem_size_bytes", "vmem_bytes"):
            v = getattr(info, attr, None)
            if v:
                return int(v)
    except Exception:
        pass
    return 64 * 1024 * 1024


def _est_glue_vmem(tm, e, tn):
    """Rough VMEM bytes for the x-in-HBM path (lane/sublane padded)."""
    x = 2 * _round_up(tm, 8) * _round_up(e, 128) * 2        # bf16 x, 2 buffers
    w = 2 * _round_up(e, 8) * _round_up(tn, 128) * 2        # bf16 W (<=2 buffers)
    b = 2 * 8 * _round_up(tn, 128) * 4
    o = 2 * _round_up(tm, 8) * _round_up(tn, 128) * 4       # f32 out, 2 buffers
    return x + w + b + o + (4 << 20)


def _est_fused_vmem(tm, e, hp, v, p):
    """Rough VMEM bytes for the fused in-kernel-gather path."""
    ids = 2 * 2 * _round_up(tm, 8) * 128 * 4                # two id columns
    tabs = (_round_up(v, 8) + _round_up(p, 8)) * _round_up(e, 128) * 2
    w = _round_up(e, 8) * hp * 2
    b = 8 * hp * 4
    o = 2 * _round_up(tm, 8) * hp * 4
    oh = 2 * _round_up(tm, 8) * (_round_up(v, 128) + _round_up(p, 128)) * 4
    return ids + tabs + w + b + o + oh + (4 << 20)


def _ln_dense_tail(x_f32, w_ref, b_ref, out_ref):
    """LayerNorm (affine pre-folded into W/b) + dense on the MXU.

    x_f32 : [TM, E]  f32
    w_ref : [E, TN]  bf16 (gamma already folded in)
    b_ref : [1, TN]  f32  (beta @ W + bias already folded in)
    """
    mean = jnp.mean(x_f32, axis=-1, keepdims=True)
    xm = x_f32 - mean
    var = jnp.mean(xm * xm, axis=-1, keepdims=True)
    xhat = xm * jax.lax.rsqrt(var + _LN_EPS)
    y = jnp.dot(xhat.astype(w_ref.dtype), w_ref[...],
                preferred_element_type=jnp.float32) + b_ref[...]
    out_ref[...] = y.astype(out_ref.dtype)
    # TODO(synk): nn.Dropout is identity in eval mode; train-mode dropout
    # (pltpu.prng_random_bits mask) is not implemented here.


def _ln_dense_kernel(x_ref, w_ref, b_ref, out_ref):
    # x_ref: [TM, E] bf16 (token+positional already summed in XLA glue).
    _ln_dense_tail(x_ref[...].astype(jnp.float32), w_ref, b_ref, out_ref)


def _embed_ln_dense_kernel(tok_ref, pos_ref, wtab_ref, ptab_ref,
                           w_ref, b_ref, out_ref):
    # Fully fused path: gather (one-hot @ table on the MXU) + add + LN + dense.
    # tok_ref/pos_ref : [TM, 1] int32 row ids
    # wtab_ref        : [V, E]  bf16 word-embedding table (resident)
    # ptab_ref        : [P, E]  bf16 positional table (resident)
    tm = tok_ref.shape[0]
    v = wtab_ref.shape[0]
    p = ptab_ref.shape[0]
    tok_oh = jnp.where(
        tok_ref[...] == jax.lax.broadcasted_iota(jnp.int32, (tm, v), 1),
        1.0, 0.0).astype(wtab_ref.dtype)
    pos_oh = jnp.where(
        pos_ref[...] == jax.lax.broadcasted_iota(jnp.int32, (tm, p), 1),
        1.0, 0.0).astype(ptab_ref.dtype)
    x = (jnp.dot(tok_oh, wtab_ref[...], preferred_element_type=jnp.float32)
         + jnp.dot(pos_oh, ptab_ref[...], preferred_element_type=jnp.float32))
    _ln_dense_tail(x, w_ref, b_ref, out_ref)


def embeddings_forward(input_ids, word_emb_table, pos_emb_table,
                       ln_gamma, ln_beta, dense_w, dense_b,
                       position_ids=None, row_tile=512):
    """
    input_ids      : int32 [src_len, batch]
    word_emb_table : [vocab_size, E]
    pos_emb_table  : [max_position_embeddings, E]
    dense_w        : [E, H]   (x @ W layout)
    returns        : [src_len, batch, H]  float32
    """
    S, B = input_ids.shape
    V, E = word_emb_table.shape
    P = pos_emb_table.shape[0]
    H = dense_w.shape[1]
    N = S * B

    if position_ids is None:
        position_ids = jnp.arange(S, dtype=jnp.int32)[None, :]
    pos_vec = position_ids[0, :S].astype(jnp.int32)

    # ---- fold LayerNorm affine into the dense weight/bias:
    #      (xhat*g + b) @ W + c  ==  xhat @ (g[:,None]*W) + (b @ W + c)
    w_f32 = dense_w.astype(jnp.float32)
    w_folded = w_f32 * ln_gamma.astype(jnp.float32)[:, None]          # [E, H]
    b_folded = dense_b.astype(jnp.float32) + ln_beta.astype(jnp.float32) @ w_f32

    # ---- lane-dense output: pad H up to a multiple of 128 (sliced off later).
    Hp = _round_up(H, 128)
    if Hp != H:
        w_folded = jnp.pad(w_folded, ((0, 0), (0, Hp - H)))
        b_folded = jnp.pad(b_folded, (0, Hp - H))
    w_bf16 = w_folded.astype(jnp.bfloat16)            # MXU is bf16-native
    b_2d = b_folded.reshape(1, Hp)

    # ---- balanced row tile: <=7 padded rows per block, and >=2 row blocks so
    #      dimension_semantics=('parallel',) can shard across v7x's 2 TCs.
    n_row = max(2, _cdiv(N, row_tile)) if N >= 16 else 1
    tm = _round_up(_cdiv(N, n_row), 8)

    # ---- generation-aware VMEM budget (v5e/v6e: 128 MiB, v7x: 64 MiB phys).
    budget = (3 * _physical_vmem_bytes()) // 4

    # ---- column-tile the dense weight only if it cannot stay resident.
    tn = Hp
    if _est_glue_vmem(tm, E, tn) > budget:
        for cand in range(Hp, 0, -128):
            if Hp % cand == 0 and _est_glue_vmem(tm, E, cand) <= budget:
                tn = cand
                break
        else:
            tn = 128
    while _est_glue_vmem(tm, E, tn) > budget and tm > 8:
        tm = max(8, _round_up(tm // 2, 8))
    n_pad = _round_up(N, tm)
    n_row = n_pad // tm
    n_col = Hp // tn

    # ---- fused in-kernel gather only when both tables comfortably fit VMEM
    #      (one-hot gather cost scales with vocab, so also cap table rows).
    tables_bytes = (V + P) * E * 2
    use_fused = (V <= 1024 and P <= 1024 and tables_bytes <= (4 << 20)
                 and _est_fused_vmem(tm, E, Hp, V, P) <= budget)

    vmem_est = (_est_fused_vmem(tm, E, Hp, V, P) if use_fused
                else _est_glue_vmem(tm, E, tn))
    vmem_limit = int(min(budget, max(32 << 20, vmem_est)))

    if use_fused:
        # NOTE: padded rows use id 0 (in range); their outputs are sliced off.
        ids_col = input_ids.reshape(N, 1).astype(jnp.int32)
        pos_col = jnp.repeat(pos_vec, B).reshape(N, 1)
        if n_pad != N:
            ids_col = jnp.pad(ids_col, ((0, n_pad - N), (0, 0)))
            pos_col = jnp.pad(pos_col, ((0, n_pad - N), (0, 0)))
        wtab = word_emb_table.astype(jnp.bfloat16)
        ptab = pos_emb_table.astype(jnp.bfloat16)
        x = None
    else:
        # XLA glue: fused gather + gather + add, materialized ONCE in bf16
        # (half the HBM bytes of an f32 slab).
        # NOTE: jnp.take clamps out-of-range ids (PyTorch would raise); the
        # padding_idx row is whatever the caller stored in the table.
        ids_flat = input_ids.reshape(N).astype(jnp.int32)
        pos_flat = jnp.repeat(pos_vec, B)
        x = (jnp.take(word_emb_table, ids_flat, axis=0)
             + jnp.take(pos_emb_table, pos_flat, axis=0)).astype(jnp.bfloat16)
        if n_pad != N:
            x = jnp.pad(x, ((0, n_pad - N), (0, 0)))

    def run(single_buffer):
        def resident(shape, index_map):
            # Grid-invariant operand: single-buffer to halve its VMEM footprint.
            if single_buffer:
                return pl.BlockSpec(shape, index_map,
                                    pipeline_mode=pl.Buffered(1))
            return pl.BlockSpec(shape, index_map)

        if use_fused:
            grid_spec = pltpu.PrefetchScalarGridSpec(
                num_scalar_prefetch=0,
                grid=(n_row,),
                in_specs=[
                    pl.BlockSpec((tm, 1), lambda i: (i, 0)),   # token ids
                    pl.BlockSpec((tm, 1), lambda i: (i, 0)),   # position ids
                    resident((V, E), lambda i: (0, 0)),        # word table
                    resident((P, E), lambda i: (0, 0)),        # pos table
                    resident((E, Hp), lambda i: (0, 0)),       # folded dense W
                    resident((1, Hp), lambda i: (0, 0)),       # folded bias
                ],
                out_specs=pl.BlockSpec((tm, Hp), lambda i: (i, 0)),
            )
            return pl.pallas_call(
                _embed_ln_dense_kernel,
                out_shape=jax.ShapeDtypeStruct((n_pad, Hp), jnp.float32),
                grid_spec=grid_spec,
                compiler_params=pltpu.CompilerParams(
                    dimension_semantics=("parallel",),
                    vmem_limit_bytes=vmem_limit),
            )(ids_col, pos_col, wtab, ptab, w_bf16, b_2d)

        w_const = (n_col == 1)
        w_spec = (resident((E, tn), lambda i, j: (0, j)) if w_const
                  else pl.BlockSpec((E, tn), lambda i, j: (0, j)))
        b_spec = (resident((1, tn), lambda i, j: (0, j)) if w_const
                  else pl.BlockSpec((1, tn), lambda i, j: (0, j)))
        grid_spec = pltpu.PrefetchScalarGridSpec(
            num_scalar_prefetch=0,
            grid=(n_row, n_col),
            in_specs=[
                pl.BlockSpec((tm, E), lambda i, j: (i, 0)),    # bf16 x rows
                w_spec,
                b_spec,
            ],
            out_specs=pl.BlockSpec((tm, tn), lambda i, j: (i, j)),
        )
        return pl.pallas_call(
            _ln_dense_kernel,
            out_shape=jax.ShapeDtypeStruct((n_pad, Hp), jnp.float32),
            grid_spec=grid_spec,
            compiler_params=pltpu.CompilerParams(
                dimension_semantics=("parallel", "parallel"),
                vmem_limit_bytes=vmem_limit),
        )(x, w_bf16, b_2d)

    try:
        out_flat = run(single_buffer=True)
    except Exception:
        # Fallback if pipeline_mode=pl.Buffered(1) is unsupported by this jax.
        out_flat = run(single_buffer=False)

    return out_flat[:N, :H].reshape(S, B, H)


if __name__ == "__main__":
    # config: vocab_size=64, embedding_size=32, hidden_size=32,
    #         max_position_embeddings=256, pad_token_id=0, initializer_range=0.02
    vocab_size = 64
    embedding_size = 32
    hidden_size = 32
    max_position_embeddings = 256
    initializer_range = 0.02
    pad_token_id = 0
    src_len, batch = 8, 2

    key = jax.random.PRNGKey(0)
    k_word, k_pos, k_w, k_b, k_ids = jax.random.split(key, 5)

    # Parameter init mirrors the module: embedding tables ~ N(0, 0.02);
    # nn.Embedding(padding_idx=pad_token_id) zero-initializes the padding row.
    word_emb_table = initializer_range * jax.random.normal(
        k_word, (vocab_size, embedding_size), dtype=jnp.float32)
    word_emb_table = word_emb_table.at[pad_token_id].set(0.0)
    pos_emb_table = initializer_range * jax.random.normal(
        k_pos, (max_position_embeddings, embedding_size), dtype=jnp.float32)

    # LayerNorm defaults: weight=1, bias=0
    ln_gamma = jnp.ones((embedding_size,), dtype=jnp.float32)
    ln_beta = jnp.zeros((embedding_size,), dtype=jnp.float32)

    # Dense (nn.Linear) params — deterministic synthetic init.
    dense_w = initializer_range * jax.random.normal(
        k_w, (embedding_size, hidden_size), dtype=jnp.float32)
    dense_b = initializer_range * jax.random.normal(
        k_b, (hidden_size,), dtype=jnp.float32)

    input_ids = jax.random.randint(
        k_ids, (src_len, batch), minval=0, maxval=vocab_size, dtype=jnp.int32)

    out = embeddings_forward(input_ids, word_emb_table, pos_emb_table,
                             ln_gamma, ln_beta, dense_w, dense_b)
    out = jax.block_until_ready(out)

    # pure-f32 reference matching the PyTorch module (eval mode; the kernel's
    # bf16 table / MXU boundaries contribute ~1e-3-scale deltas).
    tok = jnp.take(word_emb_table, input_ids, axis=0)                  # [S,B,E]
    pos = jnp.take(pos_emb_table, jnp.arange(src_len), axis=0)[:, None, :]
    xr = tok + pos
    mu = jnp.mean(xr, axis=-1, keepdims=True)
    xm = xr - mu
    va = jnp.mean(xm * xm, axis=-1, keepdims=True)
    xhat = xm * jax.lax.rsqrt(va + 1e-5) * ln_gamma + ln_beta
    ref = jnp.einsum("sbe,eh->sbh", xhat, dense_w) + dense_b

    assert out.shape == (src_len, batch, hidden_size)
    err = float(jnp.max(jnp.abs(out - ref)))
    assert bool(jnp.allclose(out, ref, atol=5e-3, rtol=1e-2)), err
    print("KERNEL_OK")
</pallas_src>

<mosaic_0001>
module attributes {stable_mosaic.version = 11 : i64} {
  func.func @_embed_ln_dense_kernel(%arg0: i32, %arg1: memref<8x1xi32, #tpu.memory_space<vmem>>, %arg2: memref<8x1xi32, #tpu.memory_space<vmem>>, %arg3: memref<64x32xbf16, #tpu.memory_space<vmem>>, %arg4: memref<256x32xbf16, #tpu.memory_space<vmem>>, %arg5: memref<32x128xbf16, #tpu.memory_space<vmem>>, %arg6: memref<1x128xf32, #tpu.memory_space<vmem>>, %arg7: memref<8x128xf32, #tpu.memory_space<vmem>>) attributes {dimension_semantics = [#tpu.dimension_semantics<parallel>], iteration_bounds = array<i64: 2>, scalar_prefetch = 0 : i64, scratch_operands = 0 : i64, tpu.core_type = #tpu.core_type<tc>, window_params = [{transform_indices = @transform_0, window_bounds = array<i64: 8, 1>}, {transform_indices = @transform_1, window_bounds = array<i64: 8, 1>}, {pipeline_mode = #tpu.pipeline_mode<synchronous>, transform_indices = @transform_2, window_bounds = array<i64: 64, 32>}, {pipeline_mode = #tpu.pipeline_mode<synchronous>, transform_indices = @transform_3, window_bounds = array<i64: 256, 32>}, {pipeline_mode = #tpu.pipeline_mode<synchronous>, transform_indices = @transform_4, window_bounds = array<i64: 32, 128>}, {pipeline_mode = #tpu.pipeline_mode<synchronous>, transform_indices = @transform_5, window_bounds = array<i64: 1, 128>}, {transform_indices = @transform_6, window_bounds = array<i64: 8, 128>}]} {
    %c0 = arith.constant 0 : index
    %c0_0 = arith.constant 0 : index
    %0 = vector.load %arg1[%c0, %c0_0] : memref<8x1xi32, #tpu.memory_space<vmem>>, vector<8x1xi32>
    %1 = tpu.iota {dimensions = array<i32: 1>} : vector<8x64xi32>
    %2 = vector.broadcast %0 : vector<8x1xi32> to vector<8x64xi32>
    %3 = arith.cmpi eq, %2, %1 : vector<8x64xi32>
    %cst = arith.constant 1.000000e+00 : f32
    %cst_1 = arith.constant 0.000000e+00 : f32
    %4 = vector.broadcast %cst : f32 to vector<8x64xf32>
    %5 = vector.broadcast %cst_1 : f32 to vector<8x64xf32>
    %6 = arith.select %3, %4, %5 : vector<8x64xi1>, vector<8x64xf32>
    %7 = arith.truncf %6 : vector<8x64xf32> to vector<8x64xbf16>
    %c0_2 = arith.constant 0 : index
    %c0_3 = arith.constant 0 : index
    %8 = vector.load %arg2[%c0_2, %c0_3] : memref<8x1xi32, #tpu.memory_space<vmem>>, vector<8x1xi32>
    %9 = tpu.iota {dimensions = array<i32: 1>} : vector<8x256xi32>
    %10 = vector.broadcast %8 : vector<8x1xi32> to vector<8x256xi32>
    %11 = arith.cmpi eq, %10, %9 : vector<8x256xi32>
    %cst_4 = arith.constant 1.000000e+00 : f32
    %cst_5 = arith.constant 0.000000e+00 : f32
    %12 = vector.broadcast %cst_4 : f32 to vector<8x256xf32>
    %13 = vector.broadcast %cst_5 : f32 to vector<8x256xf32>
    %14 = arith.select %11, %12, %13 : vector<8x256xi1>, vector<8x256xf32>
    %15 = arith.truncf %14 : vector<8x256xf32> to vector<8x256xbf16>
    %c0_6 = arith.constant 0 : index
    %c0_7 = arith.constant 0 : index
    %16 = vector.load %arg3[%c0_6, %c0_7] : memref<64x32xbf16, #tpu.memory_space<vmem>>, vector<64x32xbf16>
    %cst_8 = arith.constant dense<0.000000e+00> : vector<8x32xf32>
    %17 = tpu.matmul %7, %16, %cst_8 {dimension_numbers = #tpu.dot_dimension_numbers<[1], [0], [0], [1], [0, 0, 1, 1], [], []>} : vector<8x64xbf16>, vector<64x32xbf16>, vector<8x32xf32> -> vector<8x32xf32>
    %c0_9 = arith.constant 0 : index
    %c0_10 = arith.constant 0 : index
    %18 = vector.load %arg4[%c0_9, %c0_10] : memref<256x32xbf16, #tpu.memory_space<vmem>>, vector<256x32xbf16>
    %cst_11 = arith.constant dense<0.000000e+00> : vector<8x32xf32>
    %19 = tpu.matmul %15, %18, %cst_11 {dimension_numbers = #tpu.dot_dimension_numbers<[1], [0], [0], [1], [0, 0, 1, 1], [], []>} : vector<8x256xbf16>, vector<256x32xbf16>, vector<8x32xf32> -> vector<8x32xf32>
    %20 = arith.addf %17, %19 : vector<8x32xf32>
    %cst_12 = arith.constant dense<0.000000e+00> : vector<8xf32>
    %21 = vector.multi_reduction <add>, %20, %cst_12 [1] : vector<8x32xf32> to vector<8xf32>
    %22 = vector.shape_cast %21 : vector<8xf32> to vector<8x1xf32>
    %cst_13 = arith.constant 3.200000e+01 : f32
    %23 = vector.broadcast %cst_13 : f32 to vector<8x1xf32>
    %24 = arith.divf %22, %23 : vector<8x1xf32>
    %25 = vector.broadcast %24 : vector<8x1xf32> to vector<8x32xf32>
    %26 = arith.subf %20, %25 : vector<8x32xf32>
    %27 = arith.mulf %26, %26 : vector<8x32xf32>
    %cst_14 = arith.constant dense<0.000000e+00> : vector<8xf32>
    %28 = vector.multi_reduction <add>, %27, %cst_14 [1] : vector<8x32xf32> to vector<8xf32>
    %29 = vector.shape_cast %28 : vector<8xf32> to vector<8x1xf32>
    %cst_15 = arith.constant 3.200000e+01 : f32
    %30 = vector.broadcast %cst_15 : f32 to vector<8x1xf32>
    %31 = arith.divf %29, %30 : vector<8x1xf32>
    %cst_16 = arith.constant 9.99999974E-6 : f32
    %32 = vector.broadcast %cst_16 : f32 to vector<8x1xf32>
    %33 = arith.addf %31, %32 : vector<8x1xf32>
    %34 = math.rsqrt %33 : vector<8x1xf32>
    %35 = vector.broadcast %34 : vector<8x1xf32> to vector<8x32xf32>
    %36 = arith.mulf %26, %35 : vector<8x32xf32>
    %37 = arith.truncf %36 : vector<8x32xf32> to vector<8x32xbf16>
    %c0_17 = arith.constant 0 : index
    %c0_18 = arith.constant 0 : index
    %38 = vector.load %arg5[%c0_17, %c0_18] : memref<32x128xbf16, #tpu.memory_space<vmem>>, vector<32x128xbf16>
    %cst_19 = arith.constant dense<0.000000e+00> : vector<8x128xf32>
    %39 = tpu.matmul %37, %38, %cst_19 {dimension_numbers = #tpu.dot_dimension_numbers<[1], [0], [0], [1], [0, 0, 1, 1], [], []>} : vector<8x32xbf16>, vector<32x128xbf16>, vector<8x128xf32> -> vector<8x128xf32>
    %c0_20 = arith.constant 0 : index
    %c0_21 = arith.constant 0 : index
    %40 = vector.load %arg6[%c0_20, %c0_21] : memref<1x128xf32, #tpu.memory_space<vmem>>, vector<1x128xf32>
    %41 = vector.broadcast %40 : vector<1x128xf32> to vector<8x128xf32>
    %42 = arith.addf %39, %41 : vector<8x128xf32>
    %c0_22 = arith.constant 0 : index
    %c0_23 = arith.constant 0 : index
    %43 = vector.load %arg7[%c0_22, %c0_23] : memref<8x128xf32, #tpu.memory_space<vmem>>, vector<8x128xf32>
    tpu.vector_store %arg7[%c0_22, %c0_23], %42 {strides = array<i32>} : memref<8x128xf32, #tpu.memory_space<vmem>>, vector<8x128xf32>,
    return
  }
  func.func @transform_0(%arg0: i32) -> (i32, i32) {
    %c0_i32 = arith.constant 0 : i32
    %c0_i32_0 = arith.constant 0 : i32
    return %arg0, %c0_i32 : i32, i32
  }
  func.func @transform_1(%arg0: i32) -> (i32, i32) {
    %c0_i32 = arith.constant 0 : i32
    %c0_i32_0 = arith.constant 0 : i32
    return %arg0, %c0_i32 : i32, i32
  }
  func.func @transform_2(%arg0: i32) -> (i32, i32) {
    %c0_i32 = arith.constant 0 : i32
    %c0_i32_0 = arith.constant 0 : i32
    %c0_i32_1 = arith.constant 0 : i32
    return %c0_i32, %c0_i32_0 : i32, i32
  }
  func.func @transform_3(%arg0: i32) -> (i32, i32) {
    %c0_i32 = arith.constant 0 : i32
    %c0_i32_0 = arith.constant 0 : i32
    %c0_i32_1 = arith.constant 0 : i32
    return %c0_i32, %c0_i32_0 : i32, i32
  }
  func.func @transform_4(%arg0: i32) -> (i32, i32) {
    %c0_i32 = arith.constant 0 : i32
    %c0_i32_0 = arith.constant 0 : i32
    %c0_i32_1 = arith.constant 0 : i32
    return %c0_i32, %c0_i32_0 : i32, i32
  }
  func.func @transform_5(%arg0: i32) -> (i32, i32) {
    %c0_i32 = arith.constant 0 : i32
    %c0_i32_0 = arith.constant 0 : i32
    %c0_i32_1 = arith.constant 0 : i32
    return %c0_i32, %c0_i32_0 : i32, i32
  }
  func.func @transform_6(%arg0: i32) -> (i32, i32) {
    %c0_i32 = arith.constant 0 : i32
    %c0_i32_0 = arith.constant 0 : i32
    return %arg0, %c0_i32 : i32, i32
  }
}

module attributes {stable_mosaic.version = 11 : i64} {
  func.func @_embed_ln_dense_kernel(%arg0: i32, %arg1: memref<8x1xi32, #tpu.memory_space<vmem>>, %arg2: memref<8x1xi32, #tpu.memory_space<vmem>>, %arg3: memref<64x32xbf16, #tpu.memory_space<vmem>>, %arg4: memref<256x32xbf16, #tpu.memory_space<vmem>>, %arg5: memref<32x128xbf16, #tpu.memory_space<vmem>>, %arg6: memref<1x128xf32, #tpu.memory_space<vmem>>, %arg7: memref<8x128xf32, #tpu.memory_space<vmem>>) attributes {dimension_semantics = [#tpu.dimension_semantics<parallel>], iteration_bounds = array<i64: 2>, scalar_prefetch = 0 : i64, scratch_operands = 0 : i64, tpu.core_type = #tpu.core_type<tc>, window_params = [{transform_indices = @transform_0, window_bounds = array<i64: 8, 1>}, {transform_indices = @transform_1, window_bounds = array<i64: 8, 1>}, {pipeline_mode = #tpu.pipeline_mode<synchronous>, transform_indices = @transform_2, window_bounds = array<i64: 64, 32>}, {pipeline_mode = #tpu.pipeline_mode<synchronous>, transform_indices = @transform_3, window_bounds = array<i64: 256, 32>}, {pipeline_mode = #tpu.pipeline_mode<synchronous>, transform_indices = @transform_4, window_bounds = array<i64: 32, 128>}, {pipeline_mode = #tpu.pipeline_mode<synchronous>, transform_indices = @transform_5, window_bounds = array<i64: 1, 128>}, {transform_indices = @transform_6, window_bounds = array<i64: 8, 128>}]} {
    %c0 = arith.constant 0 : index
    %c0_0 = arith.constant 0 : index
    %0 = vector.load %arg1[%c0, %c0_0] : memref<8x1xi32, #tpu.memory_space<vmem>>, vector<8x1xi32>
    %1 = tpu.iota {dimensions = array<i32: 1>} : vector<8x64xi32>
    %2 = vector.broadcast %0 : vector<8x1xi32> to vector<8x64xi32>
    %3 = arith.cmpi eq, %2, %1 : vector<8x64xi32>
    %cst = arith.constant 1.000000e+00 : f32
    %cst_1 = arith.constant 0.000000e+00 : f32
    %4 = vector.broadcast %cst : f32 to vector<8x64xf32>
    %5 = vector.broadcast %cst_1 : f32 to vector<8x64xf32>
    %6 = arith.select %3, %4, %5 : vector<8x64xi1>, vector<8x64xf32>
    %7 = arith.truncf %6 : vector<8x64xf32> to vector<8x64xbf16>
    %c0_2 = arith.constant 0 : index
    %c0_3 = arith.constant 0 : index
    %8 = vector.load %arg2[%c0_2, %c0_3] : memref<8x1xi32, #tpu.memory_space<vmem>>, vector<8x1xi32>
    %9 = tpu.iota {dimensions = array<i32: 1>} : vector<8x256xi32>
    %10 = vector.broadcast %8 : vector<8x1xi32> to vector<8x256xi32>
    %11 = arith.cmpi eq, %10, %9 : vector<8x256xi32>
    %cst_4 = arith.constant 1.000000e+00 : f32
    %cst_5 = arith.constant 0.000000e+00 : f32
    %12 = vector.broadcast %cst_4 : f32 to vector<8x256xf32>
    %13 = vector.broadcast %cst_5 : f32 to vector<8x256xf32>
    %14 = arith.select %11, %12, %13 : vector<8x256xi1>, vector<8x256xf32>
    %15 = arith.truncf %14 : vector<8x256xf32> to vector<8x256xbf16>
    %c0_6 = arith.constant 0 : index
    %c0_7 = arith.constant 0 : index
    %16 = vector.load %arg3[%c0_6, %c0_7] : memref<64x32xbf16, #tpu.memory_space<vmem>>, vector<64x32xbf16>
    %cst_8 = arith.constant dense<0.000000e+00> : vector<8x32xf32>
    %17 = tpu.matmul %7, %16, %cst_8 {dimension_numbers = #tpu.dot_dimension_numbers<[1], [0], [0], [1], [0, 0, 1, 1], [], []>} : vector<8x64xbf16>, vector<64x32xbf16>, vector<8x32xf32> -> vector<8x32xf32>
    %c0_9 = arith.constant 0 : index
    %c0_10 = arith.constant 0 : index
    %18 = vector.load %arg4[%c0_9, %c0_10] : memref<256x32xbf16, #tpu.memory_space<vmem>>, vector<256x32xbf16>
    %cst_11 = arith.constant dense<0.000000e+00> : vector<8x32xf32>
    %19 = tpu.matmul %15, %18, %cst_11 {dimension_numbers = #tpu.dot_dimension_numbers<[1], [0], [0], [1], [0, 0, 1, 1], [], []>} : vector<8x256xbf16>, vector<256x32xbf16>, vector<8x32xf32> -> vector<8x32xf32>
    %20 = arith.addf %17, %19 : vector<8x32xf32>
    %cst_12 = arith.constant dense<0.000000e+00> : vector<8xf32>
    %21 = vector.multi_reduction <add>, %20, %cst_12 [1] : vector<8x32xf32> to vector<8xf32>
    %22 = vector.shape_cast %21 : vector<8xf32> to vector<8x1xf32>
    %cst_13 = arith.constant 3.200000e+01 : f32
    %23 = vector.broadcast %cst_13 : f32 to vector<8x1xf32>
    %24 = arith.divf %22, %23 : vector<8x1xf32>
    %25 = vector.broadcast %24 : vector<8x1xf32> to vector<8x32xf32>
    %26 = arith.subf %20, %25 : vector<8x32xf32>
    %27 = arith.mulf %26, %26 : vector<8x32xf32>
    %cst_14 = arith.constant dense<0.000000e+00> : vector<8xf32>
    %28 = vector.multi_reduction <add>, %27, %cst_14 [1] : vector<8x32xf32> to vector<8xf32>
    %29 = vector.shape_cast %28 : vector<8xf32> to vector<8x1xf32>
    %cst_15 = arith.constant 3.200000e+01 : f32
    %30 = vector.broadcast %cst_15 : f32 to vector<8x1xf32>
    %31 = arith.divf %29, %30 : vector<8x1xf32>
    %cst_16 = arith.constant 9.99999974E-6 : f32
    %32 = vector.broadcast %cst_16 : f32 to vector<8x1xf32>
    %33 = arith.addf %31, %32 : vector<8x1xf32>
    %34 = math.rsqrt %33 : vector<8x1xf32>
    %35 = vector.broadcast %34 : vector<8x1xf32> to vector<8x32xf32>
    %36 = arith.mulf %26, %35 : vector<8x32xf32>
    %37 = arith.truncf %36 : vector<8x32xf32> to vector<8x32xbf16>
    %c0_17 = arith.constant 0 : index
    %c0_18 = arith.constant 0 : index
    %38 = vector.load %arg5[%c0_17, %c0_18] : memref<32x128xbf16, #tpu.memory_space<vmem>>, vector<32x128xbf16>
    %cst_19 = arith.constant dense<0.000000e+00> : vector<8x128xf32>
    %39 = tpu.matmul %37, %38, %cst_19 {dimension_numbers = #tpu.dot_dimension_numbers<[1], [0], [0], [1], [0, 0, 1, 1], [], []>} : vector<8x32xbf16>, vector<32x128xbf16>, vector<8x128xf32> -> vector<8x128xf32>
    %c0_20 = arith.constant 0 : index
    %c0_21 = arith.constant 0 : index
    %40 = vector.load %arg6[%c0_20, %c0_21] : memref<1x128xf32, #tpu.memory_space<vmem>>, vector<1x128xf32>
    %41 = vector.broadcast %40 : vector<1x128xf32> to vector<8x128xf32>
    %42 = arith.addf %39, %41 : vector<8x128xf32>
    %c0_22 = arith.constant 0 : index
    %c0_23 = arith.constant 0 : index
    %43 = vector.load %arg7[%c0_22, %c0_23] : memref<8x128xf32, #tpu.memory_space<vmem>>, vector<8x128xf32>
    tpu.vector_store %arg7[%c0_22, %c0_23], %42 {strides = array<i32>} : memref<8x128xf32, #tpu.memory_space<vmem>>, vector<8x128xf32>,
    return
  }
  func.func @transform_0(%arg0: i32) -> (i32, i32) {
    %c0_i32 = arith.constant 0 : i32
    %c0_i32_0 = arith.constant 0 : i32
    return %arg0, %c0_i32 : i32, i32
  }
  func.func @transform_1(%arg0: i32) -> (i32, i32) {
    %c0_i32 = arith.constant 0 : i32
    %c0_i32_0 = arith.constant 0 : i32
    return %arg0, %c0_i32 : i32, i32
  }
  func.func @transform_2(%arg0: i32) -> (i32, i32) {
    %c0_i32 = arith.constant 0 : i32
    %c0_i32_0 = arith.constant 0 : i32
    %c0_i32_1 = arith.constant 0 : i32
    return %c0_i32, %c0_i32_0 : i32, i32
  }
  func.func @transform_3(%arg0: i32) -> (i32, i32) {
    %c0_i32 = arith.constant 0 : i32
    %c0_i32_0 = arith.constant 0 : i32
    %c0_i32_1 = arith.constant 0 : i32
    return %c0_i32, %c0_i32_0 : i32, i32
  }
  func.func @transform_4(%arg0: i32) -> (i32, i32) {
    %c0_i32 = arith.constant 0 : i32
    %c0_i32_0 = arith.constant 0 : i32
    %c0_i32_1 = arith.constant 0 : i32
    return %c0_i32, %c0_i32_0 : i32, i32
  }
  func.func @transform_5(%arg0: i32) -> (i32, i32) {
    %c0_i32 = arith.constant 0 : i32
    %c0_i32_0 = arith.constant 0 : i32
    %c0_i32_1 = arith.constant 0 : i32
    return %c0_i32, %c0_i32_0 : i32, i32
  }
  func.func @transform_6(%arg0: i32) -> (i32, i32) {
    %c0_i32 = arith.constant 0 : i32
    %c0_i32_0 = arith.constant 0 : i32
    return %arg0, %c0_i32 : i32, i32
  }
}

</mosaic_0001>

<llo_original>
// kernel: tpu_custom_call.1
$region0: #{tpu_custom_call.1}
  #allocation0 [shape = 'u32[]', space=smem, size = 0x4, offset = 0x4, fixed_abs, tag = 'smem constant byte address 0x4 - core index']
  #allocation1 [shape = 'u32[144,128]{1,0:T(1,128)}', space=vmem, size = 0x12000, scoped, tag = 'internal scratch']
  %s0 = inlined_call_operand.vmem [shape: s32[16,1], index: 0, kind: input, shape index: {}]
  %s1 = inlined_call_operand.vmem [shape: s32[16,1], index: 1, kind: input, shape index: {}]
  %s2 = inlined_call_operand.vmem [shape: bf16[64,32], index: 2, kind: input, shape index: {}]
  %s3 = inlined_call_operand.vmem [shape: bf16[256,32], index: 3, kind: input, shape index: {}]
  %s4 = inlined_call_operand.vmem [shape: bf16[32,128], index: 4, kind: input, shape index: {}]
  %s5 = inlined_call_operand.vmem [shape: f32[1,128], index: 5, kind: input, shape index: {}]
  %s6 = inlined_call_operand.hbm [shape: f32[16,128], index: 6, kind: output, shape index: {}]
  %s7 = sld [smem:[#allocation0]]
  $region57: #{tpu_custom_call.1} parent=0
    _
  %s9 = ssub.s32 1, %s7
  %s10 = scalar_select 0, %s9, %s7
  $region1: #{tpu_custom_call.1} parent=0
    #allocation2 [shape = 'u8[8192]{0}', space=vmem, size = 0x2000, scoped, tag = 'output window, operand 0']
    #allocation3 [shape = 's32[2]{0}', space=sflag, size = 0x8, scoped, tag = 'scoped memory for tpu_custom_call.1']
    %11 = vsyncpa [#allocation3], 0
    %s12 = scalar_lea.sflag [#allocation3], 1
    %13 = vsyncpa %s12, 0
    loop: start=0, step=1, limit=4
    $region2: #{tpu_custom_call.1} parent=1 // loop_pre_header
      _
    $region3: #{tpu_custom_call.1} parent=1 // loop_header
      %s15 = sphi 0, %s19
      %p16 = scmp.ge.s32.totalorder %s15, 4
      %s25 = sphi 0, %s27
      %s28 = sphi 0, %s25
      %s29 = sphi 0, %s28
      %s45 = sphi 0, %s29
      %s51 = sphi 0, %s53
      %s54 = sphi 0, %s51
      %s55 = sphi 0, %s54
      %s71 = sphi 0, %s55
      %s75 = sphi 0, %s75
      %s77 = sphi 0, %s75
      %s78 = sphi 0, %s77
      %s92 = sphi 0, %s78
      %s96 = sphi 0, %s96
      %s98 = sphi 0, %s96
      %s99 = sphi 0, %s98
      %s113 = sphi 0, %s99
      %s117 = sphi 0, %s117
      %s119 = sphi 0, %s117
      %s120 = sphi 0, %s119
      %s134 = sphi 0, %s120
      %s138 = sphi 0, %s138
      %s140 = sphi 0, %s138
      %s141 = sphi 0, %s140
      %s155 = sphi 0, %s141
      %s161 = sphi 0, %s163
      %s164 = sphi 0, %s161
      %s165 = sphi 0, %s164
      %s181 = sphi 0, %s165
    $region4: #{tpu_custom_call.1} parent=1 // loop_header_branch
      %18 = sbr.rel (%p16) target = $region8
    $region5: #{tpu_custom_call.1} parent=1 // loop_body
      %s20 = ssub.s32 %s15, 1
      %s21 = ssub.s32 %s15, 2
      %s22 = sadd.s32 %s15, 1
      %s23 = ssub.s32 %s15, %s22
      %p24 = scmp.eq.s32.totalorder %s23, 0
      %s26 = sadd.s32 %s25, 1
      %s27 = scalar_select %p24, %s25, %s26
      %p30 = pneg %p24
      %p31 = scmp.eq.s32.totalorder %s15, 1
      %p32 = por %p30, %p31
      %p33 = scmp.ne.s32.totalorder %s25, %s28
      %p34 = scmp.eq.s32.totalorder %s15, 0
      %p35 = por %p33, %p34
      %p36 = scmp.ne.s32.totalorder %s25, %s28
      %p37 = scmp.eq.s32.totalorder %s20, 1
      %p38 = por %p36, %p37
      %p39 = scmp.ne.s32.totalorder %s28, %s29
      %p40 = scmp.eq.s32.totalorder %s20, 0
      %p41 = por %p39, %p40
      %p42 = scmp.ne.s32.totalorder %s28, %s29
      %p43 = scmp.eq.s32.totalorder %s21, 1
      %p44 = por %p42, %p43
      %p46 = scmp.ne.s32.totalorder %s29, %s45
      %p47 = scmp.eq.s32.totalorder %s21, 0
      %p48 = por %p46, %p47
      %s49 = ssub.s32 %s15, %s22
      %p50 = scmp.eq.s32.totalorder %s49, 0
      %s52 = sadd.s32 %s51, 1
      %s53 = scalar_select %p50, %s51, %s52
      %p56 = pneg %p50
      %p57 = scmp.eq.s32.totalorder %s15, 1
      %p58 = por %p56, %p57
      %p59 = scmp.ne.s32.totalorder %s51, %s54
      %p60 = scmp.eq.s32.totalorder %s15, 0
      %p61 = por %p59, %p60
      %p62 = scmp.ne.s32.totalorder %s51, %s54
      %p63 = scmp.eq.s32.totalorder %s20, 1
      %p64 = por %p62, %p63
      %p65 = scmp.ne.s32.totalorder %s54, %s55
      %p66 = scmp.eq.s32.totalorder %s20, 0
      %p67 = por %p65, %p66
      %p68 = scmp.ne.s32.totalorder %s54, %s55
      %p69 = scmp.eq.s32.totalorder %s21, 1
      %p70 = por %p68, %p69
      %p72 = scmp.ne.s32.totalorder %s55, %s71
      %p73 = scmp.eq.s32.totalorder %s21, 0
      %p74 = por %p72, %p73
      %s76 = sadd.s32 %s75, 1
      %p79 = scmp.eq.s32.totalorder %s15, 1
      %p80 = scmp.ne.s32.totalorder %s75, %s77
      %p81 = scmp.eq.s32.totalorder %s15, 0
      %p82 = por %p80, %p81
      %p83 = scmp.ne.s32.totalorder %s75, %s77
      %p84 = scmp.eq.s32.totalorder %s20, 1
      %p85 = por %p83, %p84
      %p86 = scmp.ne.s32.totalorder %s77, %s78
      %p87 = scmp.eq.s32.totalorder %s20, 0
      %p88 = por %p86, %p87
      %p89 = scmp.ne.s32.totalorder %s77, %s78
      %p90 = scmp.eq.s32.totalorder %s21, 1
      %p91 = por %p89, %p90
      %p93 = scmp.ne.s32.totalorder %s78, %s92
      %p94 = scmp.eq.s32.totalorder %s21, 0
      %p95 = por %p93, %p94
      %s97 = sadd.s32 %s96, 1
      %p100 = scmp.eq.s32.totalorder %s15, 1
      %p101 = scmp.ne.s32.totalorder %s96, %s98
      %p102 = scmp.eq.s32.totalorder %s15, 0
      %p103 = por %p101, %p102
      %p104 = scmp.ne.s32.totalorder %s96, %s98
      %p105 = scmp.eq.s32.totalorder %s20, 1
      %p106 = por %p104, %p105
      %p107 = scmp.ne.s32.totalorder %s98, %s99
      %p108 = scmp.eq.s32.totalorder %s20, 0
      %p109 = por %p107, %p108
      %p110 = scmp.ne.s32.totalorder %s98, %s99
      %p111 = scmp.eq.s32.totalorder %s21, 1
      %p112 = por %p110, %p111
      %p114 = scmp.ne.s32.totalorder %s99, %s113
      %p115 = scmp.eq.s32.totalorder %s21, 0
      %p116 = por %p114, %p115
      %s118 = sadd.s32 %s117, 1
      %p121 = scmp.eq.s32.totalorder %s15, 1
      %p122 = scmp.ne.s32.totalorder %s117, %s119
      %p123 = scmp.eq.s32.totalorder %s15, 0
      %p124 = por %p122, %p123
      %p125 = scmp.ne.s32.totalorder %s117, %s119
      %p126 = scmp.eq.s32.totalorder %s20, 1
      %p127 = por %p125, %p126
      %p128 = scmp.ne.s32.totalorder %s119, %s120
      %p129 = scmp.eq.s32.totalorder %s20, 0
      %p130 = por %p128, %p129
      %p131 = scmp.ne.s32.totalorder %s119, %s120
      %p132 = scmp.eq.s32.totalorder %s21, 1
      %p133 = por %p131, %p132
      %p135 = scmp.ne.s32.totalorder %s120, %s134
      %p136 = scmp.eq.s32.totalorder %s21, 0
      %p137 = por %p135, %p136
      %s139 = sadd.s32 %s138, 1
      %p142 = scmp.eq.s32.totalorder %s15, 1
      %p143 = scmp.ne.s32.totalorder %s138, %s140
      %p144 = scmp.eq.s32.totalorder %s15, 0
      %p145 = por %p143, %p144
      %p146 = scmp.ne.s32.totalorder %s138, %s140
      %p147 = scmp.eq.s32.totalorder %s20, 1
      %p148 = por %p146, %p147
      %p149 = scmp.ne.s32.totalorder %s140, %s141
      %p150 = scmp.eq.s32.totalorder %s20, 0
      %p151 = por %p149, %p150
      %p152 = scmp.ne.s32.totalorder %s140, %s141
      %p153 = scmp.eq.s32.totalorder %s21, 1
      %p154 = por %p152, %p153
      %p156 = scmp.ne.s32.totalorder %s141, %s155
      %p157 = scmp.eq.s32.totalorder %s21, 0
      %p158 = por %p156, %p157
      %s159 = ssub.s32 %s15, %s22
      %p160 = scmp.eq.s32.totalorder %s159, 0
      %s162 = sadd.s32 %s161, 1
      %s163 = scalar_select %p160, %s161, %s162
      %p166 = pneg %p160
      %p167 = scmp.eq.s32.totalorder %s15, 1
      %p168 = por %p166, %p167
      %p169 = scmp.ne.s32.totalorder %s161, %s164
      %p170 = scmp.eq.s32.totalorder %s15, 0
      %p171 = por %p169, %p170
      %p172 = scmp.ne.s32.totalorder %s161, %s164
      %p173 = scmp.eq.s32.totalorder %s20, 1
      %p174 = por %p172, %p173
      %p175 = scmp.ne.s32.totalorder %s164, %s165
      %p176 = scmp.eq.s32.totalorder %s20, 0
      %p177 = por %p175, %p176
      %p178 = scmp.ne.s32.totalorder %s164, %s165
      %p179 = scmp.eq.s32.totalorder %s21, 1
      %p180 = por %p178, %p179
      %p182 = scmp.ne.s32.totalorder %s165, %s181
      %p183 = scmp.eq.s32.totalorder %s21, 0
      %p184 = por %p182, %p183
      %p185 = scmp.le.s32.totalorder 1, %s15
      %p186 = scmp.lt.s32.totalorder %s15, 3
      %p187 = pnand %p185, %p186
      %p188 = pneg %p187
      // Predicated region
      $region9: #{tpu_custom_call.1} parent=5 // pred_check
        _
      $region10: #{tpu_custom_call.1} parent=5 // pred_check_branch
        %190 = sbr.rel (%p187) target = $region12
      $region11: #{tpu_custom_call.1} parent=5 // pred_region
        %s191 = ssub.s32 %s15, 1
        // Predicated region
        $region13: #{tpu_custom_call.1} parent=11 // pred_check
          %p192 = pneg %p88
        $region14: #{tpu_custom_call.1} parent=11 // pred_check_branch
          %194 = sbr.rel (%p192) target = $region16
        $region15: #{tpu_custom_call.1} parent=11 // pred_region
          _
        $region16: #{tpu_custom_call.1} parent=11 // pred_fallthru
          _
        // Predicated region
        $region17: #{tpu_custom_call.1} parent=11 // pred_check
          %p195 = pneg %p109
        $region18: #{tpu_custom_call.1} parent=11 // pred_check_branch
          %197 = sbr.rel (%p195) target = $region20
        $region19: #{tpu_custom_call.1} parent=11 // pred_region
          _
        $region20: #{tpu_custom_call.1} parent=11 // pred_fallthru
          _
        // Predicated region
        $region21: #{tpu_custom_call.1} parent=11 // pred_check
          %p198 = pneg %p130
        $region22: #{tpu_custom_call.1} parent=11 // pred_check_branch
          %200 = sbr.rel (%p198) target = $region24
        $region23: #{tpu_custom_call.1} parent=11 // pred_region
          _
        $region24: #{tpu_custom_call.1} parent=11 // pred_fallthru
          _
        // Predicated region
        $region25: #{tpu_custom_call.1} parent=11 // pred_check
          %p201 = pneg %p151
        $region26: #{tpu_custom_call.1} parent=11 // pred_check_branch
          %203 = sbr.rel (%p201) target = $region28
        $region27: #{tpu_custom_call.1} parent=11 // pred_region
          _
        $region28: #{tpu_custom_call.1} parent=11 // pred_fallthru
          _
      $region12: #{tpu_custom_call.1} parent=5 // pred_fallthru
        _
      %p204 = scmp.lt.s32.totalorder %s15, 2
      // Predicated region
      $region29: #{tpu_custom_call.1} parent=5 // pred_check
        %p205 = pneg %p204
      $region30: #{tpu_custom_call.1} parent=5 // pred_check_branch
        %207 = sbr.rel (%p205) target = $region32
      $region31: #{tpu_custom_call.1} parent=5 // pred_region
        // Predicated region
        $region33: #{tpu_custom_call.1} parent=31 // pred_check
          %p208 = pneg %p35
        $region34: #{tpu_custom_call.1} parent=31 // pred_check_branch
          %210 = sbr.rel (%p208) target = $region36
        $region35: #{tpu_custom_call.1} parent=31 // pred_region
          %p211 = scmp.lt.s32.totalorder %s15, 1
          %s212 = scalar_select %p211, %s15, 1
          %s213 = smul.addr %s212, 8
          %s214 = scalar_lea.vmem %s0, %s213
        $region36: #{tpu_custom_call.1} parent=31 // pred_fallthru
          _
        // Predicated region
        $region37: #{tpu_custom_call.1} parent=31 // pred_check
          %p215 = pneg %p61
        $region38: #{tpu_custom_call.1} parent=31 // pred_check_branch
          %217 = sbr.rel (%p215) target = $region40
        $region39: #{tpu_custom_call.1} parent=31 // pred_region
          %p218 = scmp.lt.s32.totalorder %s15, 1
          %s219 = scalar_select %p218, %s15, 1
          %s220 = smul.addr %s219, 8
          %s221 = scalar_lea.vmem %s1, %s220
        $region40: #{tpu_custom_call.1} parent=31 // pred_fallthru
          _
      $region32: #{tpu_custom_call.1} parent=5 // pred_fallthru
        _
      %p222 = scmp.le.s32.totalorder 1, %s15
      %p223 = scmp.lt.s32.totalorder %s15, 3
      %p224 = pnand %p222, %p223
      %p225 = pneg %p224
      // Predicated region
      $region41: #{tpu_custom_call.1} parent=5 // pred_check
        _
      $region42: #{tpu_custom_call.1} parent=5 // pred_check_branch
        %227 = sbr.rel (%p224) target = $region44
      $region43: #{tpu_custom_call.1} parent=5 // pred_region
        %s228 = ssub.s32 %s15, 1
        %p229 = scmp.lt.s32.totalorder %s20, 1
        %s230 = scalar_select %p229, %s20, 1
        %s231 = smul.addr %s230, 8
        %s232 = scalar_lea.vmem %s0, %s231
        %p233 = pneg %p41
        %p234 = pneg %p38
        %p235 = scmp.lt.s32.totalorder %s20, 1
        %s236 = scalar_select %p235, %s20, 1
        %s237 = smul.addr %s236, 8
        %s238 = scalar_lea.vmem %s1, %s237
        %p239 = pneg %p67
        %p240 = pneg %p64
        %p241 = pneg %p88
        %p242 = pneg %p85
        %p243 = pneg %p109
        %p244 = pneg %p106
        %p245 = pneg %p130
        %p246 = pneg %p127
        %p247 = pneg %p151
        %p248 = pneg %p148
        %p249 = pneg %p177
        %p250 = pneg %p174
        %s251 = sand.u32 %s164, 1
        %s252 = scalar_lea.sflag [#allocation3], %s251
        %s253 = sand.u32 %s164, 1
        %s254 = smul.addr %s253, 8
        %s255 = scalar_lea.vmem [#allocation2], %s254
        %p256 = scmp.lt.s32.totalorder %s20, 1
        %s257 = scalar_select %p256, %s20, 1
        %s258 = smul.addr %s257, 8
        %s259 = scalar_lea.vmem %s0, %s258
        %p260 = scmp.lt.s32.totalorder %s20, 1
        %s261 = scalar_select %p260, %s20, 1
        %s262 = smul.addr %s261, 8
        %s263 = scalar_lea.vmem %s1, %s262
        %v265 = vld [vmem:[%s259] sm:$0xff]
        %v266 = vlaneseq
        %v267 = vand.u32 %v266, 127
        %268 = vset.pattern.permute.xlu0 0
        %269 = vperm.xlu0 %268, %v265
        %v270 = vpop.permute.xlu0 %269
        %vm271 = vcmp.eq.s32.totalorder %v270, %v267
        %v272 = vsel %vm271, 1.0, 0.0
        %v273 = vpack.c.bf16 %v272, %v272
        %v274 = vld [vmem:[%s263] sm:$0xff]
        %v275 = vadd.s32 %v267, 128
        %276 = vset.pattern.permute.xlu0 0
        %277 = vperm.xlu0 %276, %v274
        %v278 = vpop.permute.xlu0 %277
        %vm279 = vcmp.eq.s32.totalorder %v278, %v267
        %vm280 = vcmp.eq.s32.totalorder %v278, %v275
        %v281 = vsel %vm279, 1.0, 0.0
        %v282 = vsel %vm280, 1.0, 0.0
        %v283 = vpack.c.bf16 %v281, %v281
        %v284 = vpack.c.bf16 %v282, %v282
        %v285 = vld [vmem:[%s2] sm:$0xf]
        %v286 = vld [vmem:[%s2 + $0x4] sm:$0xf]
        %v287 = vld [vmem:[%s2 + $0x8] sm:$0xf]
        %v288 = vld [vmem:[%s2 + $0xc] sm:$0xf]
        %v289 = vld [vmem:[%s2 + $0x10] sm:$0xf]
        %v290 = vld [vmem:[%s2 + $0x14] sm:$0xf]
        %v291 = vld [vmem:[%s2 + $0x18] sm:$0xf]
        %v292 = vld [vmem:[%s2 + $0x1c] sm:$0xf]
        %v293 = vld [vmem:[%s3] sm:$0xf]
        %v294 = vld [vmem:[%s3 + $0x4] sm:$0xf]
        %v295 = vld [vmem:[%s3 + $0x8] sm:$0xf]
        %v296 = vld [vmem:[%s3 + $0xc] sm:$0xf]
        %v297 = vld [vmem:[%s3 + $0x10] sm:$0xf]
        %v298 = vld [vmem:[%s3 + $0x14] sm:$0xf]
        %v299 = vld [vmem:[%s3 + $0x18] sm:$0xf]
        %v300 = vld [vmem:[%s3 + $0x1c] sm:$0xf]
        %v301 = vld [vmem:[%s3 + $0x20] sm:$0xf]
        %v302 = vld [vmem:[%s3 + $0x24] sm:$0xf]
        %v303 = vld [vmem:[%s3 + $0x28] sm:$0xf]
        %v304 = vld [vmem:[%s3 + $0x2c] sm:$0xf]
        %v305 = vld [vmem:[%s3 + $0x30] sm:$0xf]
        %v306 = vld [vmem:[%s3 + $0x34] sm:$0xf]
        %v307 = vld [vmem:[%s3 + $0x38] sm:$0xf]
        %v308 = vld [vmem:[%s3 + $0x3c] sm:$0xf]
        %v309 = vld [vmem:[%s3 + $0x40] sm:$0xf]
        %v310 = vld [vmem:[%s3 + $0x44] sm:$0xf]
        %v311 = vld [vmem:[%s3 + $0x48] sm:$0xf]
        %v312 = vld [vmem:[%s3 + $0x4c] sm:$0xf]
        %v313 = vld [vmem:[%s3 + $0x50] sm:$0xf]
        %v314 = vld [vmem:[%s3 + $0x54] sm:$0xf]
        %v315 = vld [vmem:[%s3 + $0x58] sm:$0xf]
        %v316 = vld [vmem:[%s3 + $0x5c] sm:$0xf]
        %v317 = vld [vmem:[%s3 + $0x60] sm:$0xf]
        %v318 = vld [vmem:[%s3 + $0x64] sm:$0xf]
        %v319 = vld [vmem:[%s3 + $0x68] sm:$0xf]
        %v320 = vld [vmem:[%s3 + $0x6c] sm:$0xf]
        %v321 = vld [vmem:[%s3 + $0x70] sm:$0xf]
        %v322 = vld [vmem:[%s3 + $0x74] sm:$0xf]
        %v323 = vld [vmem:[%s3 + $0x78] sm:$0xf]
        %v324 = vld [vmem:[%s3 + $0x7c] sm:$0xf]
        %v357 = vunpack.c.l.b16 %v293
        %v358 = vunpack.c.l.b16 %v294
        %v359 = vunpack.c.l.b16 %v295
        %v360 = vunpack.c.l.b16 %v296
        %v361 = vunpack.c.l.b16 %v297
        %v362 = vunpack.c.l.b16 %v298
        %v363 = vunpack.c.l.b16 %v299
        %v364 = vunpack.c.l.b16 %v300
        %v365 = vunpack.c.l.b16 %v301
        %v366 = vunpack.c.l.b16 %v302
        %v367 = vunpack.c.l.b16 %v303
        %v368 = vunpack.c.l.b16 %v304
        %v369 = vunpack.c.l.b16 %v305
        %v370 = vunpack.c.l.b16 %v306
        %v371 = vunpack.c.l.b16 %v307
        %v372 = vunpack.c.l.b16 %v308
        %v373 = vunpack.c.l.b16 %v309
        %v374 = vunpack.c.l.b16 %v310
        %v375 = vunpack.c.l.b16 %v311
        %v376 = vunpack.c.l.b16 %v312
        %v377 = vunpack.c.l.b16 %v313
        %v378 = vunpack.c.l.b16 %v314
        %v379 = vunpack.c.l.b16 %v315
        %v380 = vunpack.c.l.b16 %v316
        %v381 = vunpack.c.l.b16 %v317
        %v382 = vunpack.c.l.b16 %v318
        %v383 = vunpack.c.l.b16 %v319
        %v384 = vunpack.c.l.b16 %v320
        %v385 = vunpack.c.l.b16 %v321
        %v386 = vunpack.c.l.b16 %v322
        %v387 = vunpack.c.l.b16 %v323
        %v388 = vunpack.c.l.b16 %v324
        %v389 = vpack.c.b16 %v358, %v357
        %v390 = vpack.c.b16 %v360, %v359
        %v391 = vpack.c.b16 %v362, %v361
        %v392 = vpack.c.b16 %v364, %v363
        %v393 = vpack.c.b16 %v366, %v365
        %v394 = vpack.c.b16 %v368, %v367
        %v395 = vpack.c.b16 %v370, %v369
        %v396 = vpack.c.b16 %v372, %v371
        %v397 = vpack.c.b16 %v374, %v373
        %v398 = vpack.c.b16 %v376, %v375
        %v399 = vpack.c.b16 %v378, %v377
        %v400 = vpack.c.b16 %v380, %v379
        %v401 = vpack.c.b16 %v382, %v381
        %v402 = vpack.c.b16 %v384, %v383
        %v403 = vpack.c.b16 %v386, %v385
        %v404 = vpack.c.b16 %v388, %v387
        %421 = vmatprep.subr.bf16.mxu0 0
        %422 = vmatpush1.bf16.msra.mxu0 %v389
        %423 = vmatprep.subr.bf16.mxu0 0
        %424 = vmatpush1.bf16.msra.mxu0 %v390
        %425 = vmatprep.subr.bf16.mxu0 0
        %426 = vmatpush1.bf16.msra.mxu0 %v391
        %427 = vmatprep.subr.bf16.mxu0 0
        %428 = vmatpush1.bf16.msra.mxu0 %v392
        %429 = vmatprep.subr.bf16.mxu0 0
        %430 = vmatpush1.bf16.msra.mxu0 %v393
        %431 = vmatprep.subr.bf16.mxu0 0
        %432 = vmatpush1.bf16.msra.mxu0 %v394
        %433 = vmatprep.subr.bf16.mxu0 0
        %434 = vmatpush1.bf16.msra.mxu0 %v395
        %435 = vmatprep.subr.bf16.mxu0 0
        %436 = vmatpush1.bf16.msra.mxu0 %v396
        %437 = vmatprep.subr.bf16.mxu0 0
        %438 = vmatpush1.bf16.msra.mxu0 %v397
        %439 = vmatprep.subr.bf16.mxu0 0
        %440 = vmatpush1.bf16.msra.mxu0 %v398
        %441 = vmatprep.subr.bf16.mxu0 0
        %442 = vmatpush1.bf16.msra.mxu0 %v399
        %443 = vmatprep.subr.bf16.mxu0 0
        %444 = vmatpush1.bf16.msra.mxu0 %v400
        %445 = vmatprep.subr.bf16.mxu0 0
        %446 = vmatpush1.bf16.msra.mxu0 %v401
        %447 = vmatprep.subr.bf16.mxu0 0
        %448 = vmatpush1.bf16.msra.mxu0 %v402
        %449 = vmatprep.subr.bf16.mxu0 0
        %450 = vmatpush1.bf16.msra.mxu0 %v403
        %451 = vmatprep.subr.bf16.mxu0 0
        %452 = vmatpush1.bf16.msra.mxu0 %v404
        %453 = vmatprep.mubr.bf16.mxu0 %v284
        %454 = vmatmul.mubr.bf16.gmra.mrb[0].mxu0 %v283
        %v455 = vpop.f32.mrb[0].mxu0
        %v456 = vadd.f32 0.0, %v455
        %v457 = vpop.f32.mrb[0].mxu0
        %v458 = vpop.f32.mrb[0].mxu0
        %v459 = vpop.f32.mrb[0].mxu0
        %460 = vdwg.mxu0
        %v469 = vunpack.c.l.b16 %v285
        %v470 = vunpack.c.l.b16 %v286
        %v471 = vunpack.c.l.b16 %v287
        %v472 = vunpack.c.l.b16 %v288
        %v473 = vunpack.c.l.b16 %v289
        %v474 = vunpack.c.l.b16 %v290
        %v475 = vunpack.c.l.b16 %v291
        %v476 = vunpack.c.l.b16 %v292
        %v477 = vpack.c.b16 %v470, %v469
        %v478 = vpack.c.b16 %v472, %v471
        %v479 = vpack.c.b16 %v474, %v473
        %v480 = vpack.c.b16 %v476, %v475
        %vm485 = vcmask 523264
        %v487 = vsel %vm485, %v273, 0
        %489 = vmatprep.subr.bf16.mxu0 0
        %490 = vmatpush1.bf16.msra.mxu0 %v477
        %491 = vmatprep.subr.bf16.mxu0 0
        %492 = vmatpush1.bf16.msra.mxu0 %v478
        %493 = vmatprep.subr.bf16.mxu0 0
        %494 = vmatpush1.bf16.msra.mxu0 %v479
        %495 = vmatprep.subr.bf16.mxu0 0
        %496 = vmatpush1.bf16.msra.mxu0 %v480
        %497 = vmatprep.subr.bf16.mxu0 0
        %498 = vmatpush1.bf16.msra.mxu0 0
        %499 = vmatprep.subr.bf16.mxu0 0
        %500 = vmatpush1.bf16.msra.mxu0 0
        %501 = vmatprep.subr.bf16.mxu0 0
        %502 = vmatpush1.bf16.msra.mxu0 0
        %503 = vmatprep.subr.bf16.mxu0 0
        %504 = vmatpush1.bf16.msra.mxu0 0
        %505 = vmatprep.subr.bf16.mxu0 0
        %506 = vmatpush1.bf16.msra.mxu0 0
        %507 = vmatprep.subr.bf16.mxu0 0
        %508 = vmatpush1.bf16.msra.mxu0 0
        %509 = vmatprep.subr.bf16.mxu0 0
        %510 = vmatpush1.bf16.msra.mxu0 0
        %511 = vmatprep.subr.bf16.mxu0 0
        %512 = vmatpush1.bf16.msra.mxu0 0
        %513 = vmatprep.subr.bf16.mxu0 0
        %514 = vmatpush1.bf16.msra.mxu0 0
        %515 = vmatprep.subr.bf16.mxu0 0
        %516 = vmatpush1.bf16.msra.mxu0 0
        %517 = vmatprep.subr.bf16.mxu0 0
        %518 = vmatpush1.bf16.msra.mxu0 0
        %519 = vmatprep.subr.bf16.mxu0 0
        %520 = vmatpush1.bf16.msra.mxu0 0
        %521 = vmatprep.mubr.bf16.mxu0 0
        %522 = vmatmul.mubr.bf16.gmra.mrb[0].mxu0 %v487
        %v523 = vpop.f32.mrb[0].mxu0
        %v524 = vadd.f32 %v456, %v523
        %v525 = vpop.f32.mrb[0].mxu0
        %v526 = vpop.f32.mrb[0].mxu0
        %v527 = vpop.f32.mrb[0].mxu0
        %528 = vdwg.mxu0
        %vm529 = vcmask 261120
        %v530 = vsel %vm529, %v524, 0.0
        %531 = vadd.xlane.f32.xlu0 %v530
        %v532 = vpop.xlane.xlu0 %531
        %v533 = vrcp.pop 32.0
        %v534 = vmul.f32 %v532, %v533
        %v535 = vsub.f32 %v524, %v534
        %v536 = vmul.f32 %v535, %v535
        %v537 = vsel %vm529, %v536, 0.0
        %538 = vadd.xlane.f32.xlu0 %v537
        %v539 = vpop.xlane.xlu0 %538
        %v540 = vmul.f32 %v539, %v533
        %v541 = vadd.f32 %v540, 1e-05
        %v542 = vrsqrt.pop %v541
        %v543 = vmul.f32 %v535, %v542
        %v544 = vpack.c.bf16 %v543, %v543
        %v545 = vld [vmem:[%s4] sm:$0xf]
        %v546 = vld [vmem:[%s4 + $0x4] sm:$0xf]
        %v547 = vld [vmem:[%s4 + $0x8] sm:$0xf]
        %v548 = vld [vmem:[%s4 + $0xc] sm:$0xf]
        %v549 = vld [vmem:[%s5] sm:$0x1]
        %v551 = vlaneseq
        %v552 = vshrl.u32 %v551, 7
        %v553 = vsub.s32 0, %v552
        %v554 = vrot.slane %v549, %v553
        %v560 = vunpack.c.l.b16 %v545
        %v561 = vunpack.c.l.b16 %v546
        %v562 = vunpack.c.l.b16 %v547
        %v563 = vunpack.c.l.b16 %v548
        %v564 = vpack.c.b16 %v561, %v560
        %v565 = vpack.c.b16 %v563, %v562
        %v569 = vsel %vm529, %v544, 0
        %571 = vmatprep.subr.bf16.mxu0 0
        %572 = vmatpush1.bf16.msra.mxu0 %v564
        %573 = vmatprep.subr.bf16.mxu0 0
        %574 = vmatpush1.bf16.msra.mxu0 %v565
        %575 = vmatprep.subr.bf16.mxu0 0
        %576 = vmatpush1.bf16.msra.mxu0 0
        %577 = vmatprep.subr.bf16.mxu0 0
        %578 = vmatpush1.bf16.msra.mxu0 0
        %579 = vmatprep.subr.bf16.mxu0 0
        %580 = vmatpush1.bf16.msra.mxu0 0
        %581 = vmatprep.subr.bf16.mxu0 0
        %582 = vmatpush1.bf16.msra.mxu0 0
        %583 = vmatprep.subr.bf16.mxu0 0
        %584 = vmatpush1.bf16.msra.mxu0 0
        %585 = vmatprep.subr.bf16.mxu0 0
        %586 = vmatpush1.bf16.msra.mxu0 0
        %587 = vmatprep.subr.bf16.mxu0 0
        %588 = vmatpush1.bf16.msra.mxu0 0
        %589 = vmatprep.subr.bf16.mxu0 0
        %590 = vmatpush1.bf16.msra.mxu0 0
        %591 = vmatprep.subr.bf16.mxu0 0
        %592 = vmatpush1.bf16.msra.mxu0 0
        %593 = vmatprep.subr.bf16.mxu0 0
        %594 = vmatpush1.bf16.msra.mxu0 0
        %595 = vmatprep.subr.bf16.mxu0 0
        %596 = vmatpush1.bf16.msra.mxu0 0
        %597 = vmatprep.subr.bf16.mxu0 0
        %598 = vmatpush1.bf16.msra.mxu0 0
        %599 = vmatprep.subr.bf16.mxu0 0
        %600 = vmatpush1.bf16.msra.mxu0 0
        %601 = vmatprep.subr.bf16.mxu0 0
        %602 = vmatpush1.bf16.msra.mxu0 0
        %603 = vmatprep.mubr.bf16.mxu0 0
        %604 = vmatmul.mubr.bf16.gmra.mrb[0].mxu0 %v569
        %v605 = vpop.f32.mrb[0].mxu0
        %v606 = vadd.f32 %v554, %v605
        %v607 = vpop.f32.mrb[0].mxu0
        %v608 = vpop.f32.mrb[0].mxu0
        %v609 = vpop.f32.mrb[0].mxu0
        %610 = vdwg.mxu0
        %611 = vst [vmem:[%s255] sm:$0xff] %v606
        %s612 = sand.u32 %s164, 1
        %s613 = scalar_lea.sflag [#allocation3], %s612
        %s614 = sand.u32 %s164, 1
        %s615 = smul.addr %s614, 8
        %s616 = scalar_lea.vmem [#allocation2], %s615
        // Predicated region
        $region45: #{tpu_custom_call.1} parent=43 // pred_check
          %p617 = pneg %p174
        $region46: #{tpu_custom_call.1} parent=43 // pred_check_branch
          %619 = sbr.rel (%p617) target = $region48
        $region47: #{tpu_custom_call.1} parent=43 // pred_region
          %s621 = ssub.s32 128, 128
          %622 = vsyncadd %s613, %s621
          %s623 = smul.addr %s20, 128
          %s624 = scalar_lea.hbm %s6, %s623
          %s626 = sshll.u32 %s616, 4
          %s627 = int_to_ptr.vmem [resolvable:$true] %s626
          %629 = dma.vmem_to_hbm [thread:$0]  %s627, 128, %s624, %s613
        $region48: #{tpu_custom_call.1} parent=43 // pred_fallthru
          _
      $region44: #{tpu_custom_call.1} parent=5 // pred_fallthru
        _
      %p630 = scmp.le.s32.totalorder 2, %s15
      // Predicated region
      $region49: #{tpu_custom_call.1} parent=5 // pred_check
        %p631 = pneg %p630
      $region50: #{tpu_custom_call.1} parent=5 // pred_check_branch
        %633 = sbr.rel (%p631) target = $region52
      $region51: #{tpu_custom_call.1} parent=5 // pred_region
        %s634 = ssub.s32 %s15, 2
        // Predicated region
        $region53: #{tpu_custom_call.1} parent=51 // pred_check
          %p635 = pneg %p180
        $region54: #{tpu_custom_call.1} parent=51 // pred_check_branch
          %637 = sbr.rel (%p635) target = $region56
        $region55: #{tpu_custom_call.1} parent=51 // pred_region
          %s638 = sand.u32 %s165, 1
          %s639 = scalar_lea.sflag [#allocation3], %s638
          %s640 = sand.u32 %s165, 1
          %s641 = smul.addr %s640, 8
          %s642 = scalar_lea.vmem [#allocation2], %s641
          %643 = dma.done %s639, 128
        $region56: #{tpu_custom_call.1} parent=51 // pred_fallthru
          _
      $region52: #{tpu_custom_call.1} parent=5 // pred_fallthru
        _
    $region6: #{tpu_custom_call.1} parent=1 // loop_footer
      %s19 = sadd.s32 1, %s15
    $region7: #{tpu_custom_call.1} parent=1 // loop_footer_branch
      %14 = sbr.rel target = $region3
    $region8: #{tpu_custom_call.1} parent=1 // loop_exit
      _
    %644 = vsyncpa [#allocation3], 1
    %s645 = scalar_lea.sflag [#allocation3], 1
    %646 = vsyncpa %s645, 1

// kernel: tpu_custom_call.1
$region0: #{tpu_custom_call.1}
  #allocation0 [shape = 'u32[]', space=smem, size = 0x4, offset = 0x4, fixed_abs, tag = 'smem constant byte address 0x4 - core index']
  #allocation1 [shape = 'u32[144,128]{1,0:T(1,128)}', space=vmem, size = 0x12000, scoped, tag = 'internal scratch']
  %s0 = inlined_call_operand.vmem [shape: s32[16,1], index: 0, kind: input, shape index: {}]
  %s1 = inlined_call_operand.vmem [shape: s32[16,1], index: 1, kind: input, shape index: {}]
  %s2 = inlined_call_operand.vmem [shape: bf16[64,32], index: 2, kind: input, shape index: {}]
  %s3 = inlined_call_operand.vmem [shape: bf16[256,32], index: 3, kind: input, shape index: {}]
  %s4 = inlined_call_operand.vmem [shape: bf16[32,128], index: 4, kind: input, shape index: {}]
  %s5 = inlined_call_operand.vmem [shape: f32[1,128], index: 5, kind: input, shape index: {}]
  %s6 = inlined_call_operand.hbm [shape: f32[16,128], index: 6, kind: output, shape index: {}]
  %s7 = sld [smem:[#allocation0]]
  $region57: #{tpu_custom_call.1} parent=0
    _
  %s9 = ssub.s32 1, %s7
  %s10 = scalar_select 0, %s9, %s7
  $region1: #{tpu_custom_call.1} parent=0
    #allocation2 [shape = 'u8[8192]{0}', space=vmem, size = 0x2000, scoped, tag = 'output window, operand 0']
    #allocation3 [shape = 's32[2]{0}', space=sflag, size = 0x8, scoped, tag = 'scoped memory for tpu_custom_call.1']
    %11 = vsyncpa [#allocation3], 0
    %s12 = scalar_lea.sflag [#allocation3], 1
    %13 = vsyncpa %s12, 0
    loop: start=0, step=1, limit=4
    $region2: #{tpu_custom_call.1} parent=1 // loop_pre_header
      _
    $region3: #{tpu_custom_call.1} parent=1 // loop_header
      %s15 = sphi 0, %s19
      %p16 = scmp.ge.s32.totalorder %s15, 4
      %s25 = sphi 0, %s27
      %s28 = sphi 0, %s25
      %s29 = sphi 0, %s28
      %s45 = sphi 0, %s29
      %s51 = sphi 0, %s53
      %s54 = sphi 0, %s51
      %s55 = sphi 0, %s54
      %s71 = sphi 0, %s55
      %s75 = sphi 0, %s75
      %s77 = sphi 0, %s75
      %s78 = sphi 0, %s77
      %s92 = sphi 0, %s78
      %s96 = sphi 0, %s96
      %s98 = sphi 0, %s96
      %s99 = sphi 0, %s98
      %s113 = sphi 0, %s99
      %s117 = sphi 0, %s117
      %s119 = sphi 0, %s117
      %s120 = sphi 0, %s119
      %s134 = sphi 0, %s120
      %s138 = sphi 0, %s138
      %s140 = sphi 0, %s138
      %s141 = sphi 0, %s140
      %s155 = sphi 0, %s141
      %s161 = sphi 0, %s163
      %s164 = sphi 0, %s161
      %s165 = sphi 0, %s164
      %s181 = sphi 0, %s165
    $region4: #{tpu_custom_call.1} parent=1 // loop_header_branch
      %18 = sbr.rel (%p16) target = $region8
    $region5: #{tpu_custom_call.1} parent=1 // loop_body
      %s20 = ssub.s32 %s15, 1
      %s21 = ssub.s32 %s15, 2
      %s22 = sadd.s32 %s15, 1
      %s23 = ssub.s32 %s15, %s22
      %p24 = scmp.eq.s32.totalorder %s23, 0
      %s26 = sadd.s32 %s25, 1
      %s27 = scalar_select %p24, %s25, %s26
      %p30 = pneg %p24
      %p31 = scmp.eq.s32.totalorder %s15, 1
      %p32 = por %p30, %p31
      %p33 = scmp.ne.s32.totalorder %s25, %s28
      %p34 = scmp.eq.s32.totalorder %s15, 0
      %p35 = por %p33, %p34
      %p36 = scmp.ne.s32.totalorder %s25, %s28
      %p37 = scmp.eq.s32.totalorder %s20, 1
      %p38 = por %p36, %p37
      %p39 = scmp.ne.s32.totalorder %s28, %s29
      %p40 = scmp.eq.s32.totalorder %s20, 0
      %p41 = por %p39, %p40
      %p42 = scmp.ne.s32.totalorder %s28, %s29
      %p43 = scmp.eq.s32.totalorder %s21, 1
      %p44 = por %p42, %p43
      %p46 = scmp.ne.s32.totalorder %s29, %s45
      %p47 = scmp.eq.s32.totalorder %s21, 0
      %p48 = por %p46, %p47
      %s49 = ssub.s32 %s15, %s22
      %p50 = scmp.eq.s32.totalorder %s49, 0
      %s52 = sadd.s32 %s51, 1
      %s53 = scalar_select %p50, %s51, %s52
      %p56 = pneg %p50
      %p57 = scmp.eq.s32.totalorder %s15, 1
      %p58 = por %p56, %p57
      %p59 = scmp.ne.s32.totalorder %s51, %s54
      %p60 = scmp.eq.s32.totalorder %s15, 0
      %p61 = por %p59, %p60
      %p62 = scmp.ne.s32.totalorder %s51, %s54
      %p63 = scmp.eq.s32.totalorder %s20, 1
      %p64 = por %p62, %p63
      %p65 = scmp.ne.s32.totalorder %s54, %s55
      %p66 = scmp.eq.s32.totalorder %s20, 0
      %p67 = por %p65, %p66
      %p68 = scmp.ne.s32.totalorder %s54, %s55
      %p69 = scmp.eq.s32.totalorder %s21, 1
      %p70 = por %p68, %p69
      %p72 = scmp.ne.s32.totalorder %s55, %s71
      %p73 = scmp.eq.s32.totalorder %s21, 0
      %p74 = por %p72, %p73
      %s76 = sadd.s32 %s75, 1
      %p79 = scmp.eq.s32.totalorder %s15, 1
      %p80 = scmp.ne.s32.totalorder %s75, %s77
      %p81 = scmp.eq.s32.totalorder %s15, 0
      %p82 = por %p80, %p81
      %p83 = scmp.ne.s32.totalorder %s75, %s77
      %p84 = scmp.eq.s32.totalorder %s20, 1
      %p85 = por %p83, %p84
      %p86 = scmp.ne.s32.totalorder %s77, %s78
      %p87 = scmp.eq.s32.totalorder %s20, 0
      %p88 = por %p86, %p87
      %p89 = scmp.ne.s32.totalorder %s77, %s78
      %p90 = scmp.eq.s32.totalorder %s21, 1
      %p91 = por %p89, %p90
      %p93 = scmp.ne.s32.totalorder %s78, %s92
      %p94 = scmp.eq.s32.totalorder %s21, 0
      %p95 = por %p93, %p94
      %s97 = sadd.s32 %s96, 1
      %p100 = scmp.eq.s32.totalorder %s15, 1
      %p101 = scmp.ne.s32.totalorder %s96, %s98
      %p102 = scmp.eq.s32.totalorder %s15, 0
      %p103 = por %p101, %p102
      %p104 = scmp.ne.s32.totalorder %s96, %s98
      %p105 = scmp.eq.s32.totalorder %s20, 1
      %p106 = por %p104, %p105
      %p107 = scmp.ne.s32.totalorder %s98, %s99
      %p108 = scmp.eq.s32.totalorder %s20, 0
      %p109 = por %p107, %p108
      %p110 = scmp.ne.s32.totalorder %s98, %s99
      %p111 = scmp.eq.s32.totalorder %s21, 1
      %p112 = por %p110, %p111
      %p114 = scmp.ne.s32.totalorder %s99, %s113
      %p115 = scmp.eq.s32.totalorder %s21, 0
      %p116 = por %p114, %p115
      %s118 = sadd.s32 %s117, 1
      %p121 = scmp.eq.s32.totalorder %s15, 1
      %p122 = scmp.ne.s32.totalorder %s117, %s119
      %p123 = scmp.eq.s32.totalorder %s15, 0
      %p124 = por %p122, %p123
      %p125 = scmp.ne.s32.totalorder %s117, %s119
      %p126 = scmp.eq.s32.totalorder %s20, 1
      %p127 = por %p125, %p126
      %p128 = scmp.ne.s32.totalorder %s119, %s120
      %p129 = scmp.eq.s32.totalorder %s20, 0
      %p130 = por %p128, %p129
      %p131 = scmp.ne.s32.totalorder %s119, %s120
      %p132 = scmp.eq.s32.totalorder %s21, 1
      %p133 = por %p131, %p132
      %p135 = scmp.ne.s32.totalorder %s120, %s134
      %p136 = scmp.eq.s32.totalorder %s21, 0
      %p137 = por %p135, %p136
      %s139 = sadd.s32 %s138, 1
      %p142 = scmp.eq.s32.totalorder %s15, 1
      %p143 = scmp.ne.s32.totalorder %s138, %s140
      %p144 = scmp.eq.s32.totalorder %s15, 0
      %p145 = por %p143, %p144
      %p146 = scmp.ne.s32.totalorder %s138, %s140
      %p147 = scmp.eq.s32.totalorder %s20, 1
      %p148 = por %p146, %p147
      %p149 = scmp.ne.s32.totalorder %s140, %s141
      %p150 = scmp.eq.s32.totalorder %s20, 0
      %p151 = por %p149, %p150
      %p152 = scmp.ne.s32.totalorder %s140, %s141
      %p153 = scmp.eq.s32.totalorder %s21, 1
      %p154 = por %p152, %p153
      %p156 = scmp.ne.s32.totalorder %s141, %s155
      %p157 = scmp.eq.s32.totalorder %s21, 0
      %p158 = por %p156, %p157
      %s159 = ssub.s32 %s15, %s22
      %p160 = scmp.eq.s32.totalorder %s159, 0
      %s162 = sadd.s32 %s161, 1
      %s163 = scalar_select %p160, %s161, %s162
      %p166 = pneg %p160
      %p167 = scmp.eq.s32.totalorder %s15, 1
      %p168 = por %p166, %p167
      %p169 = scmp.ne.s32.totalorder %s161, %s164
      %p170 = scmp.eq.s32.totalorder %s15, 0
      %p171 = por %p169, %p170
      %p172 = scmp.ne.s32.totalorder %s161, %s164
      %p173 = scmp.eq.s32.totalorder %s20, 1
      %p174 = por %p172, %p173
      %p175 = scmp.ne.s32.totalorder %s164, %s165
      %p176 = scmp.eq.s32.totalorder %s20, 0
      %p177 = por %p175, %p176
      %p178 = scmp.ne.s32.totalorder %s164, %s165
      %p179 = scmp.eq.s32.totalorder %s21, 1
      %p180 = por %p178, %p179
      %p182 = scmp.ne.s32.totalorder %s165, %s181
      %p183 = scmp.eq.s32.totalorder %s21, 0
      %p184 = por %p182, %p183
      %p185 = scmp.le.s32.totalorder 1, %s15
      %p186 = scmp.lt.s32.totalorder %s15, 3
      %p187 = pnand %p185, %p186
      %p188 = pneg %p187
      // Predicated region
      $region9: #{tpu_custom_call.1} parent=5 // pred_check
        _
      $region10: #{tpu_custom_call.1} parent=5 // pred_check_branch
        %190 = sbr.rel (%p187) target = $region12
      $region11: #{tpu_custom_call.1} parent=5 // pred_region
        %s191 = ssub.s32 %s15, 1
        // Predicated region
        $region13: #{tpu_custom_call.1} parent=11 // pred_check
          %p192 = pneg %p88
        $region14: #{tpu_custom_call.1} parent=11 // pred_check_branch
          %194 = sbr.rel (%p192) target = $region16
        $region15: #{tpu_custom_call.1} parent=11 // pred_region
          _
        $region16: #{tpu_custom_call.1} parent=11 // pred_fallthru
          _
        // Predicated region
        $region17: #{tpu_custom_call.1} parent=11 // pred_check
          %p195 = pneg %p109
        $region18: #{tpu_custom_call.1} parent=11 // pred_check_branch
          %197 = sbr.rel (%p195) target = $region20
        $region19: #{tpu_custom_call.1} parent=11 // pred_region
          _
        $region20: #{tpu_custom_call.1} parent=11 // pred_fallthru
          _
        // Predicated region
        $region21: #{tpu_custom_call.1} parent=11 // pred_check
          %p198 = pneg %p130
        $region22: #{tpu_custom_call.1} parent=11 // pred_check_branch
          %200 = sbr.rel (%p198) target = $region24
        $region23: #{tpu_custom_call.1} parent=11 // pred_region
          _
        $region24: #{tpu_custom_call.1} parent=11 // pred_fallthru
          _
        // Predicated region
        $region25: #{tpu_custom_call.1} parent=11 // pred_check
          %p201 = pneg %p151
        $region26: #{tpu_custom_call.1} parent=11 // pred_check_branch
          %203 = sbr.rel (%p201) target = $region28
        $region27: #{tpu_custom_call.1} parent=11 // pred_region
          _
        $region28: #{tpu_custom_call.1} parent=11 // pred_fallthru
          _
      $region12: #{tpu_custom_call.1} parent=5 // pred_fallthru
        _
      %p204 = scmp.lt.s32.totalorder %s15, 2
      // Predicated region
      $region29: #{tpu_custom_call.1} parent=5 // pred_check
        %p205 = pneg %p204
      $region30: #{tpu_custom_call.1} parent=5 // pred_check_branch
        %207 = sbr.rel (%p205) target = $region32
      $region31: #{tpu_custom_call.1} parent=5 // pred_region
        // Predicated region
        $region33: #{tpu_custom_call.1} parent=31 // pred_check
          %p208 = pneg %p35
        $region34: #{tpu_custom_call.1} parent=31 // pred_check_branch
          %210 = sbr.rel (%p208) target = $region36
        $region35: #{tpu_custom_call.1} parent=31 // pred_region
          %p211 = scmp.lt.s32.totalorder %s15, 1
          %s212 = scalar_select %p211, %s15, 1
          %s213 = smul.addr %s212, 8
          %s214 = scalar_lea.vmem %s0, %s213
        $region36: #{tpu_custom_call.1} parent=31 // pred_fallthru
          _
        // Predicated region
        $region37: #{tpu_custom_call.1} parent=31 // pred_check
          %p215 = pneg %p61
        $region38: #{tpu_custom_call.1} parent=31 // pred_check_branch
          %217 = sbr.rel (%p215) target = $region40
        $region39: #{tpu_custom_call.1} parent=31 // pred_region
          %p218 = scmp.lt.s32.totalorder %s15, 1
          %s219 = scalar_select %p218, %s15, 1
          %s220 = smul.addr %s219, 8
          %s221 = scalar_lea.vmem %s1, %s220
        $region40: #{tpu_custom_call.1} parent=31 // pred_fallthru
          _
      $region32: #{tpu_custom_call.1} parent=5 // pred_fallthru
        _
      %p222 = scmp.le.s32.totalorder 1, %s15
      %p223 = scmp.lt.s32.totalorder %s15, 3
      %p224 = pnand %p222, %p223
      %p225 = pneg %p224
      // Predicated region
      $region41: #{tpu_custom_call.1} parent=5 // pred_check
        _
      $region42: #{tpu_custom_call.1} parent=5 // pred_check_branch
        %227 = sbr.rel (%p224) target = $region44
      $region43: #{tpu_custom_call.1} parent=5 // pred_region
        %s228 = ssub.s32 %s15, 1
        %p229 = scmp.lt.s32.totalorder %s20, 1
        %s230 = scalar_select %p229, %s20, 1
        %s231 = smul.addr %s230, 8
        %s232 = scalar_lea.vmem %s0, %s231
        %p233 = pneg %p41
        %p234 = pneg %p38
        %p235 = scmp.lt.s32.totalorder %s20, 1
        %s236 = scalar_select %p235, %s20, 1
        %s237 = smul.addr %s236, 8
        %s238 = scalar_lea.vmem %s1, %s237
        %p239 = pneg %p67
        %p240 = pneg %p64
        %p241 = pneg %p88
        %p242 = pneg %p85
        %p243 = pneg %p109
        %p244 = pneg %p106
        %p245 = pneg %p130
        %p246 = pneg %p127
        %p247 = pneg %p151
        %p248 = pneg %p148
        %p249 = pneg %p177
        %p250 = pneg %p174
        %s251 = sand.u32 %s164, 1
        %s252 = scalar_lea.sflag [#allocation3], %s251
        %s253 = sand.u32 %s164, 1
        %s254 = smul.addr %s253, 8
        %s255 = scalar_lea.vmem [#allocation2], %s254
        %p256 = scmp.lt.s32.totalorder %s20, 1
        %s257 = scalar_select %p256, %s20, 1
        %s258 = smul.addr %s257, 8
        %s259 = scalar_lea.vmem %s0, %s258
        %p260 = scmp.lt.s32.totalorder %s20, 1
        %s261 = scalar_select %p260, %s20, 1
        %s262 = smul.addr %s261, 8
        %s263 = scalar_lea.vmem %s1, %s262
        %v265 = vld [vmem:[%s259] sm:$0xff]
        %v266 = vlaneseq
        %v267 = vand.u32 %v266, 127
        %268 = vset.pattern.permute.xlu0 0
        %269 = vperm.xlu0 %268, %v265
        %v270 = vpop.permute.xlu0 %269
        %vm271 = vcmp.eq.s32.totalorder %v270, %v267
        %v272 = vsel %vm271, 1.0, 0.0
        %v273 = vpack.c.bf16 %v272, %v272
        %v274 = vld [vmem:[%s263] sm:$0xff]
        %v275 = vadd.s32 %v267, 128
        %276 = vset.pattern.permute.xlu0 0
        %277 = vperm.xlu0 %276, %v274
        %v278 = vpop.permute.xlu0 %277
        %vm279 = vcmp.eq.s32.totalorder %v278, %v267
        %vm280 = vcmp.eq.s32.totalorder %v278, %v275
        %v281 = vsel %vm279, 1.0, 0.0
        %v282 = vsel %vm280, 1.0, 0.0
        %v283 = vpack.c.bf16 %v281, %v281
        %v284 = vpack.c.bf16 %v282, %v282
        %v285 = vld [vmem:[%s2] sm:$0xf]
        %v286 = vld [vmem:[%s2 + $0x4] sm:$0xf]
        %v287 = vld [vmem:[%s2 + $0x8] sm:$0xf]
        %v288 = vld [vmem:[%s2 + $0xc] sm:$0xf]
        %v289 = vld [vmem:[%s2 + $0x10] sm:$0xf]
        %v290 = vld [vmem:[%s2 + $0x14] sm:$0xf]
        %v291 = vld [vmem:[%s2 + $0x18] sm:$0xf]
        %v292 = vld [vmem:[%s2 + $0x1c] sm:$0xf]
        %v293 = vld [vmem:[%s3] sm:$0xf]
        %v294 = vld [vmem:[%s3 + $0x4] sm:$0xf]
        %v295 = vld [vmem:[%s3 + $0x8] sm:$0xf]
        %v296 = vld [vmem:[%s3 + $0xc] sm:$0xf]
        %v297 = vld [vmem:[%s3 + $0x10] sm:$0xf]
        %v298 = vld [vmem:[%s3 + $0x14] sm:$0xf]
        %v299 = vld [vmem:[%s3 + $0x18] sm:$0xf]
        %v300 = vld [vmem:[%s3 + $0x1c] sm:$0xf]
        %v301 = vld [vmem:[%s3 + $0x20] sm:$0xf]
        %v302 = vld [vmem:[%s3 + $0x24] sm:$0xf]
        %v303 = vld [vmem:[%s3 + $0x28] sm:$0xf]
        %v304 = vld [vmem:[%s3 + $0x2c] sm:$0xf]
        %v305 = vld [vmem:[%s3 + $0x30] sm:$0xf]
        %v306 = vld [vmem:[%s3 + $0x34] sm:$0xf]
        %v307 = vld [vmem:[%s3 + $0x38] sm:$0xf]
        %v308 = vld [vmem:[%s3 + $0x3c] sm:$0xf]
        %v309 = vld [vmem:[%s3 + $0x40] sm:$0xf]
        %v310 = vld [vmem:[%s3 + $0x44] sm:$0xf]
        %v311 = vld [vmem:[%s3 + $0x48] sm:$0xf]
        %v312 = vld [vmem:[%s3 + $0x4c] sm:$0xf]
        %v313 = vld [vmem:[%s3 + $0x50] sm:$0xf]
        %v314 = vld [vmem:[%s3 + $0x54] sm:$0xf]
        %v315 = vld [vmem:[%s3 + $0x58] sm:$0xf]
        %v316 = vld [vmem:[%s3 + $0x5c] sm:$0xf]
        %v317 = vld [vmem:[%s3 + $0x60] sm:$0xf]
        %v318 = vld [vmem:[%s3 + $0x64] sm:$0xf]
        %v319 = vld [vmem:[%s3 + $0x68] sm:$0xf]
        %v320 = vld [vmem:[%s3 + $0x6c] sm:$0xf]
        %v321 = vld [vmem:[%s3 + $0x70] sm:$0xf]
        %v322 = vld [vmem:[%s3 + $0x74] sm:$0xf]
        %v323 = vld [vmem:[%s3 + $0x78] sm:$0xf]
        %v324 = vld [vmem:[%s3 + $0x7c] sm:$0xf]
        %v357 = vunpack.c.l.b16 %v293
        %v358 = vunpack.c.l.b16 %v294
        %v359 = vunpack.c.l.b16 %v295
        %v360 = vunpack.c.l.b16 %v296
        %v361 = vunpack.c.l.b16 %v297
        %v362 = vunpack.c.l.b16 %v298
        %v363 = vunpack.c.l.b16 %v299
        %v364 = vunpack.c.l.b16 %v300
        %v365 = vunpack.c.l.b16 %v301
        %v366 = vunpack.c.l.b16 %v302
        %v367 = vunpack.c.l.b16 %v303
        %v368 = vunpack.c.l.b16 %v304
        %v369 = vunpack.c.l.b16 %v305
        %v370 = vunpack.c.l.b16 %v306
        %v371 = vunpack.c.l.b16 %v307
        %v372 = vunpack.c.l.b16 %v308
        %v373 = vunpack.c.l.b16 %v309
        %v374 = vunpack.c.l.b16 %v310
        %v375 = vunpack.c.l.b16 %v311
        %v376 = vunpack.c.l.b16 %v312
        %v377 = vunpack.c.l.b16 %v313
        %v378 = vunpack.c.l.b16 %v314
        %v379 = vunpack.c.l.b16 %v315
        %v380 = vunpack.c.l.b16 %v316
        %v381 = vunpack.c.l.b16 %v317
        %v382 = vunpack.c.l.b16 %v318
        %v383 = vunpack.c.l.b16 %v319
        %v384 = vunpack.c.l.b16 %v320
        %v385 = vunpack.c.l.b16 %v321
        %v386 = vunpack.c.l.b16 %v322
        %v387 = vunpack.c.l.b16 %v323
        %v388 = vunpack.c.l.b16 %v324
        %v389 = vpack.c.b16 %v358, %v357
        %v390 = vpack.c.b16 %v360, %v359
        %v391 = vpack.c.b16 %v362, %v361
        %v392 = vpack.c.b16 %v364, %v363
        %v393 = vpack.c.b16 %v366, %v365
        %v394 = vpack.c.b16 %v368, %v367
        %v395 = vpack.c.b16 %v370, %v369
        %v396 = vpack.c.b16 %v372, %v371
        %v397 = vpack.c.b16 %v374, %v373
        %v398 = vpack.c.b16 %v376, %v375
        %v399 = vpack.c.b16 %v378, %v377
        %v400 = vpack.c.b16 %v380, %v379
        %v401 = vpack.c.b16 %v382, %v381
        %v402 = vpack.c.b16 %v384, %v383
        %v403 = vpack.c.b16 %v386, %v385
        %v404 = vpack.c.b16 %v388, %v387
        %421 = vmatprep.subr.bf16.mxu0 0
        %422 = vmatpush1.bf16.msra.mxu0 %v389
        %423 = vmatprep.subr.bf16.mxu0 0
        %424 = vmatpush1.bf16.msra.mxu0 %v390
        %425 = vmatprep.subr.bf16.mxu0 0
        %426 = vmatpush1.bf16.msra.mxu0 %v391
        %427 = vmatprep.subr.bf16.mxu0 0
        %428 = vmatpush1.bf16.msra.mxu0 %v392
        %429 = vmatprep.subr.bf16.mxu0 0
        %430 = vmatpush1.bf16.msra.mxu0 %v393
        %431 = vmatprep.subr.bf16.mxu0 0
        %432 = vmatpush1.bf16.msra.mxu0 %v394
        %433 = vmatprep.subr.bf16.mxu0 0
        %434 = vmatpush1.bf16.msra.mxu0 %v395
        %435 = vmatprep.subr.bf16.mxu0 0
        %436 = vmatpush1.bf16.msra.mxu0 %v396
        %437 = vmatprep.subr.bf16.mxu0 0
        %438 = vmatpush1.bf16.msra.mxu0 %v397
        %439 = vmatprep.subr.bf16.mxu0 0
        %440 = vmatpush1.bf16.msra.mxu0 %v398
        %441 = vmatprep.subr.bf16.mxu0 0
        %442 = vmatpush1.bf16.msra.mxu0 %v399
        %443 = vmatprep.subr.bf16.mxu0 0
        %444 = vmatpush1.bf16.msra.mxu0 %v400
        %445 = vmatprep.subr.bf16.mxu0 0
        %446 = vmatpush1.bf16.msra.mxu0 %v401
        %447 = vmatprep.subr.bf16.mxu0 0
        %448 = vmatpush1.bf16.msra.mxu0 %v402
        %449 = vmatprep.subr.bf16.mxu0 0
        %450 = vmatpush1.bf16.msra.mxu0 %v403
        %451 = vmatprep.subr.bf16.mxu0 0
        %452 = vmatpush1.bf16.msra.mxu0 %v404
        %453 = vmatprep.mubr.bf16.mxu0 %v284
        %454 = vmatmul.mubr.bf16.gmra.mrb[0].mxu0 %v283
        %v455 = vpop.f32.mrb[0].mxu0
        %v456 = vadd.f32 0.0, %v455
        %v457 = vpop.f32.mrb[0].mxu0
        %v458 = vpop.f32.mrb[0].mxu0
        %v459 = vpop.f32.mrb[0].mxu0
        %460 = vdwg.mxu0
        %v469 = vunpack.c.l.b16 %v285
        %v470 = vunpack.c.l.b16 %v286
        %v471 = vunpack.c.l.b16 %v287
        %v472 = vunpack.c.l.b16 %v288
        %v473 = vunpack.c.l.b16 %v289
        %v474 = vunpack.c.l.b16 %v290
        %v475 = vunpack.c.l.b16 %v291
        %v476 = vunpack.c.l.b16 %v292
        %v477 = vpack.c.b16 %v470, %v469
        %v478 = vpack.c.b16 %v472, %v471
        %v479 = vpack.c.b16 %v474, %v473
        %v480 = vpack.c.b16 %v476, %v475
        %vm485 = vcmask 523264
        %v487 = vsel %vm485, %v273, 0
        %489 = vmatprep.subr.bf16.mxu0 0
        %490 = vmatpush1.bf16.msra.mxu0 %v477
        %491 = vmatprep.subr.bf16.mxu0 0
        %492 = vmatpush1.bf16.msra.mxu0 %v478
        %493 = vmatprep.subr.bf16.mxu0 0
        %494 = vmatpush1.bf16.msra.mxu0 %v479
        %495 = vmatprep.subr.bf16.mxu0 0
        %496 = vmatpush1.bf16.msra.mxu0 %v480
        %497 = vmatprep.subr.bf16.mxu0 0
        %498 = vmatpush1.bf16.msra.mxu0 0
        %499 = vmatprep.subr.bf16.mxu0 0
        %500 = vmatpush1.bf16.msra.mxu0 0
        %501 = vmatprep.subr.bf16.mxu0 0
        %502 = vmatpush1.bf16.msra.mxu0 0
        %503 = vmatprep.subr.bf16.mxu0 0
        %504 = vmatpush1.bf16.msra.mxu0 0
        %505 = vmatprep.subr.bf16.mxu0 0
        %506 = vmatpush1.bf16.msra.mxu0 0
        %507 = vmatprep.subr.bf16.mxu0 0
        %508 = vmatpush1.bf16.msra.mxu0 0
        %509 = vmatprep.subr.bf16.mxu0 0
        %510 = vmatpush1.bf16.msra.mxu0 0
        %511 = vmatprep.subr.bf16.mxu0 0
        %512 = vmatpush1.bf16.msra.mxu0 0
        %513 = vmatprep.subr.bf16.mxu0 0
        %514 = vmatpush1.bf16.msra.mxu0 0
        %515 = vmatprep.subr.bf16.mxu0 0
        %516 = vmatpush1.bf16.msra.mxu0 0
        %517 = vmatprep.subr.bf16.mxu0 0
        %518 = vmatpush1.bf16.msra.mxu0 0
        %519 = vmatprep.subr.bf16.mxu0 0
        %520 = vmatpush1.bf16.msra.mxu0 0
        %521 = vmatprep.mubr.bf16.mxu0 0
        %522 = vmatmul.mubr.bf16.gmra.mrb[0].mxu0 %v487
        %v523 = vpop.f32.mrb[0].mxu0
        %v524 = vadd.f32 %v456, %v523
        %v525 = vpop.f32.mrb[0].mxu0
        %v526 = vpop.f32.mrb[0].mxu0
        %v527 = vpop.f32.mrb[0].mxu0
        %528 = vdwg.mxu0
        %vm529 = vcmask 261120
        %v530 = vsel %vm529, %v524, 0.0
        %531 = vadd.xlane.f32.xlu0 %v530
        %v532 = vpop.xlane.xlu0 %531
        %v533 = vrcp.pop 32.0
        %v534 = vmul.f32 %v532, %v533
        %v535 = vsub.f32 %v524, %v534
        %v536 = vmul.f32 %v535, %v535
        %v537 = vsel %vm529, %v536, 0.0
        %538 = vadd.xlane.f32.xlu0 %v537
        %v539 = vpop.xlane.xlu0 %538
        %v540 = vmul.f32 %v539, %v533
        %v541 = vadd.f32 %v540, 1e-05
        %v542 = vrsqrt.pop %v541
        %v543 = vmul.f32 %v535, %v542
        %v544 = vpack.c.bf16 %v543, %v543
        %v545 = vld [vmem:[%s4] sm:$0xf]
        %v546 = vld [vmem:[%s4 + $0x4] sm:$0xf]
        %v547 = vld [vmem:[%s4 + $0x8] sm:$0xf]
        %v548 = vld [vmem:[%s4 + $0xc] sm:$0xf]
        %v549 = vld [vmem:[%s5] sm:$0x1]
        %v551 = vlaneseq
        %v552 = vshrl.u32 %v551, 7
        %v553 = vsub.s32 0, %v552
        %v554 = vrot.slane %v549, %v553
        %v560 = vunpack.c.l.b16 %v545
        %v561 = vunpack.c.l.b16 %v546
        %v562 = vunpack.c.l.b16 %v547
        %v563 = vunpack.c.l.b16 %v548
        %v564 = vpack.c.b16 %v561, %v560
        %v565 = vpack.c.b16 %v563, %v562
        %v569 = vsel %vm529, %v544, 0
        %571 = vmatprep.subr.bf16.mxu0 0
        %572 = vmatpush1.bf16.msra.mxu0 %v564
        %573 = vmatprep.subr.bf16.mxu0 0
        %574 = vmatpush1.bf16.msra.mxu0 %v565
        %575 = vmatprep.subr.bf16.mxu0 0
        %576 = vmatpush1.bf16.msra.mxu0 0
        %577 = vmatprep.subr.bf16.mxu0 0
        %578 = vmatpush1.bf16.msra.mxu0 0
        %579 = vmatprep.subr.bf16.mxu0 0
        %580 = vmatpush1.bf16.msra.mxu0 0
        %581 = vmatprep.subr.bf16.mxu0 0
        %582 = vmatpush1.bf16.msra.mxu0 0
        %583 = vmatprep.subr.bf16.mxu0 0
        %584 = vmatpush1.bf16.msra.mxu0 0
        %585 = vmatprep.subr.bf16.mxu0 0
        %586 = vmatpush1.bf16.msra.mxu0 0
        %587 = vmatprep.subr.bf16.mxu0 0
        %588 = vmatpush1.bf16.msra.mxu0 0
        %589 = vmatprep.subr.bf16.mxu0 0
        %590 = vmatpush1.bf16.msra.mxu0 0
        %591 = vmatprep.subr.bf16.mxu0 0
        %592 = vmatpush1.bf16.msra.mxu0 0
        %593 = vmatprep.subr.bf16.mxu0 0
        %594 = vmatpush1.bf16.msra.mxu0 0
        %595 = vmatprep.subr.bf16.mxu0 0
        %596 = vmatpush1.bf16.msra.mxu0 0
        %597 = vmatprep.subr.bf16.mxu0 0
        %598 = vmatpush1.bf16.msra.mxu0 0
        %599 = vmatprep.subr.bf16.mxu0 0
        %600 = vmatpush1.bf16.msra.mxu0 0
        %601 = vmatprep.subr.bf16.mxu0 0
        %602 = vmatpush1.bf16.msra.mxu0 0
        %603 = vmatprep.mubr.bf16.mxu0 0
        %604 = vmatmul.mubr.bf16.gmra.mrb[0].mxu0 %v569
        %v605 = vpop.f32.mrb[0].mxu0
        %v606 = vadd.f32 %v554, %v605
        %v607 = vpop.f32.mrb[0].mxu0
        %v608 = vpop.f32.mrb[0].mxu0
        %v609 = vpop.f32.mrb[0].mxu0
        %610 = vdwg.mxu0
        %611 = vst [vmem:[%s255] sm:$0xff] %v606
        %s612 = sand.u32 %s164, 1
        %s613 = scalar_lea.sflag [#allocation3], %s612
        %s614 = sand.u32 %s164, 1
        %s615 = smul.addr %s614, 8
        %s616 = scalar_lea.vmem [#allocation2], %s615
        // Predicated region
        $region45: #{tpu_custom_call.1} parent=43 // pred_check
          %p617 = pneg %p174
        $region46: #{tpu_custom_call.1} parent=43 // pred_check_branch
          %619 = sbr.rel (%p617) target = $region48
        $region47: #{tpu_custom_call.1} parent=43 // pred_region
          %s621 = ssub.s32 128, 128
          %622 = vsyncadd %s613, %s621
          %s623 = smul.addr %s20, 128
          %s624 = scalar_lea.hbm %s6, %s623
          %s626 = sshll.u32 %s616, 4
          %s627 = int_to_ptr.vmem [resolvable:$true] %s626
          %629 = dma.vmem_to_hbm [thread:$0]  %s627, 128, %s624, %s613
        $region48: #{tpu_custom_call.1} parent=43 // pred_fallthru
          _
      $region44: #{tpu_custom_call.1} parent=5 // pred_fallthru
        _
      %p630 = scmp.le.s32.totalorder 2, %s15
      // Predicated region
      $region49: #{tpu_custom_call.1} parent=5 // pred_check
        %p631 = pneg %p630
      $region50: #{tpu_custom_call.1} parent=5 // pred_check_branch
        %633 = sbr.rel (%p631) target = $region52
      $region51: #{tpu_custom_call.1} parent=5 // pred_region
        %s634 = ssub.s32 %s15, 2
        // Predicated region
        $region53: #{tpu_custom_call.1} parent=51 // pred_check
          %p635 = pneg %p180
        $region54: #{tpu_custom_call.1} parent=51 // pred_check_branch
          %637 = sbr.rel (%p635) target = $region56
        $region55: #{tpu_custom_call.1} parent=51 // pred_region
          %s638 = sand.u32 %s165, 1
          %s639 = scalar_lea.sflag [#allocation3], %s638
          %s640 = sand.u32 %s165, 1
          %s641 = smul.addr %s640, 8
          %s642 = scalar_lea.vmem [#allocation2], %s641
          %643 = dma.done %s639, 128
        $region56: #{tpu_custom_call.1} parent=51 // pred_fallthru
          _
      $region52: #{tpu_custom_call.1} parent=5 // pred_fallthru
        _
    $region6: #{tpu_custom_call.1} parent=1 // loop_footer
      %s19 = sadd.s32 1, %s15
    $region7: #{tpu_custom_call.1} parent=1 // loop_footer_branch
      %14 = sbr.rel target = $region3
    $region8: #{tpu_custom_call.1} parent=1 // loop_exit
      _
    %644 = vsyncpa [#allocation3], 1
    %s645 = scalar_lea.sflag [#allocation3], 1
    %646 = vsyncpa %s645, 1

</llo_original>
